<compile_context>
chip_gen: v6e
topology: v6e:2x2x1
jax: 0.10.0
libtpu: 0.0.40
codegen_flags: <defaults>
</compile_context>

<pallas_src>
import functools

import jax
import jax.numpy as jnp
from jax import lax
from jax.experimental import pallas as pl
from jax.experimental.pallas import tpu as pltpu


def _cdiv(a, b):
    return (a + b - 1) // b


def _round_up(a, b):
    return _cdiv(a, b) * b


def _fcn_head_kernel(xm_ref, xh_ref, w1_ref, shift_ref, w2_ref, o_ref, *, tap_stride):
    # xm_ref:    (C_in, tm)        main column tile of x^T
    # xh_ref:    (C_in, halo_pad)  halo columns (start of the next tile)
    # w1_ref:    (Kh, C_mid, C_in) conv1 weights per tap, BN scale folded in
    # shift_ref: (C_mid, 1)        folded BN shift
    # w2_ref:    (C_out, C_mid)    1x1 conv weights
    # o_ref:     (C_out, tm)       transposed (lane-dense) output tile
    kh_taps, c_mid, _ = w1_ref.shape
    tm = o_ref.shape[1]

    # (C_in, tm + halo_pad) window: every tap slice is fully in VMEM.
    window = jnp.concatenate([xm_ref[...], xh_ref[...]], axis=1)

    acc = jnp.zeros((c_mid, tm), jnp.float32)
    for kh in range(kh_taps):                      # static unroll over conv taps
        start = kh * tap_stride
        xs = window[:, start:start + tm]           # (C_in, tm)
        acc = acc + jnp.dot(w1_ref[kh], xs, preferred_element_type=jnp.float32)

    h = jnp.maximum(acc + shift_ref[...], 0.0)     # BatchNorm shift + ReLU
    # TODO(synk): Dropout(0.1) omitted — inference mode (identity).
    o = jnp.dot(w2_ref[...].astype(jnp.float32), h,
                preferred_element_type=jnp.float32)            # 1x1 conv
    o_ref[...] = o.astype(o_ref.dtype)


@functools.partial(jax.jit, static_argnames=("dim_size", "tm", "compute_dtype"))
def fcn_head_nopooling(x_nchw, w1, gamma, beta, run_mean, run_var, w2,
                       *, dim_size, tm=512, eps=1e-5, compute_dtype=jnp.float32):
    """x_nchw: (N, C_in, H, W).  Returns (N, C_out, H - dim_size + 1, W)."""
    N, C_in, H, W = x_nchw.shape
    C_mid = w1.shape[0]
    C_out = w2.shape[0]
    Kh = dim_size
    H_out = H - Kh + 1
    M_full = N * H * W                       # one output column per (n, h, w)

    # --- tile geometry ------------------------------------------------------
    halo = (Kh - 1) * W                      # extra columns each tile must see
    halo_pad = max(128, _round_up(halo, 128))        # lane-aligned halo block
    tm_req = _round_up(max(tm, 128), halo_pad)
    tm_cap = _round_up(_cdiv(M_full, 2), halo_pad)   # keep >=2 grid steps (v7x)
    tm_eff = max(halo_pad, min(tm_req, tm_cap))
    G = _cdiv(M_full, tm_eff)
    Mx_pad = G * tm_eff + halo_pad
    Mo_pad = G * tm_eff
    ratio = tm_eff // halo_pad

    # --- glue: channel-major layout + folded weights (plain JAX) ------------
    xT = jnp.transpose(x_nchw, (1, 0, 2, 3)).reshape(C_in, M_full)
    xT = jnp.pad(xT, ((0, 0), (0, Mx_pad - M_full))).astype(compute_dtype)

    scale = gamma * lax.rsqrt(run_var + eps)                      # (C_mid,)
    shift = (beta - run_mean * scale).reshape(C_mid, 1).astype(jnp.float32)
    w1_t = jnp.transpose(w1[:, :, :, 0], (2, 0, 1))               # (Kh, C_mid, C_in)
    w1_s = (w1_t * scale[None, :, None]).astype(compute_dtype)    # BN scale folded
    w2_m = w2[:, :, 0, 0].astype(compute_dtype)                   # (C_out, C_mid)

    # --- VMEM budget (double-buffered tiles + weights + live values) --------
    isz = jnp.dtype(compute_dtype).itemsize
    est = (2 * C_in * (tm_eff + halo_pad) * isz       # x main + halo (dbl buf)
           + 2 * C_out * tm_eff * 4                   # output tile (dbl buf)
           + 2 * (Kh * C_mid * C_in + C_mid + C_out * C_mid) * max(isz, 4)
           + C_in * (tm_eff + halo_pad) * isz         # in-kernel window
           + 2 * C_mid * tm_eff * 4)                  # accumulator / hidden
    vmem_limit = int(min(max(4 * est, 32 * 1024 * 1024), 48 * 1024 * 1024))

    kernel = functools.partial(_fcn_head_kernel, tap_stride=W)

    oT_pad = pl.pallas_call(
        kernel,
        out_shape=jax.ShapeDtypeStruct((C_out, Mo_pad), jnp.float32),
        grid_spec=pltpu.PrefetchScalarGridSpec(
            num_scalar_prefetch=0,
            grid=(G,),
            in_specs=[
                # main tile: columns [i*tm, (i+1)*tm)
                pl.BlockSpec((C_in, tm_eff), lambda i: (0, i)),
                # halo tile: columns [(i+1)*tm, (i+1)*tm + halo_pad)
                pl.BlockSpec((C_in, halo_pad), lambda i: (0, (i + 1) * ratio)),
                # grid-invariant operands (constant index maps -> fetched once)
                pl.BlockSpec((Kh, C_mid, C_in), lambda i: (0, 0, 0)),
                pl.BlockSpec((C_mid, 1), lambda i: (0, 0)),
                pl.BlockSpec((C_out, C_mid), lambda i: (0, 0)),
            ],
            out_specs=pl.BlockSpec((C_out, tm_eff), lambda i: (0, i)),
        ),
        compiler_params=pltpu.CompilerParams(
            dimension_semantics=("parallel",),
            vmem_limit_bytes=vmem_limit,
        ),
    )(xT, xT, w1_s, shift, w2_m)

    # valid columns -> (C_out, N, H, W) -> keep h < H_out -> back to NCHW
    oT = oT_pad[:, :M_full].reshape(C_out, N, H, W)[:, :, :H_out, :]
    return jnp.transpose(oT, (1, 0, 2, 3))


def _reference(x_nchw, w1, gamma, beta, run_mean, run_var, w2, *, eps=1e-5):
    """Pure-JAX reference (lax conv, NCHW) mirroring the PyTorch module in eval mode."""
    dn = lax.conv_dimension_numbers(x_nchw.shape, w1.shape, ("NCHW", "OIHW", "NCHW"))
    h = lax.conv_general_dilated(x_nchw, w1, (1, 1), "VALID", dimension_numbers=dn)
    h = (h - run_mean[None, :, None, None]) / jnp.sqrt(run_var[None, :, None, None] + eps)
    h = h * gamma[None, :, None, None] + beta[None, :, None, None]
    h = jnp.maximum(h, 0.0)
    dn2 = lax.conv_dimension_numbers(h.shape, w2.shape, ("NCHW", "OIHW", "NCHW"))
    return lax.conv_general_dilated(h, w2, (1, 1), "VALID", dimension_numbers=dn2)


if __name__ == "__main__":
    # Small, module-consistent shapes.
    N, C_in, H, W = 2, 16, 16, 16
    dim_size = 5
    C_mid = C_in // 4          # 4
    C_out = 8                  # `channels`

    key = jax.random.PRNGKey(0)
    kx, k1, k2, kg, kb, km, kv = jax.random.split(key, 7)

    x = jax.random.normal(kx, (N, C_in, H, W), jnp.float32)
    # Conv weights (PyTorch OIHW layout), deterministic init.
    w1 = jax.random.normal(k1, (C_mid, C_in, dim_size, 1), jnp.float32) * 0.1
    w2 = jax.random.normal(k2, (C_out, C_mid, 1, 1), jnp.float32) * 0.1
    # BatchNorm parameters / running stats (inference mode).
    gamma = 1.0 + 0.1 * jax.random.normal(kg, (C_mid,), jnp.float32)
    beta = 0.1 * jax.random.normal(kb, (C_mid,), jnp.float32)
    run_mean = 0.1 * jax.random.normal(km, (C_mid,), jnp.float32)
    run_var = 1.0 + 0.1 * jax.random.uniform(kv, (C_mid,), jnp.float32)

    out = fcn_head_nopooling(x, w1, gamma, beta, run_mean, run_var, w2,
                             dim_size=dim_size)
    out = jax.block_until_ready(out)

    ref = _reference(x, w1, gamma, beta, run_mean, run_var, w2)
    assert out.shape == (N, C_out, H - dim_size + 1, W), out.shape
    err = float(jnp.max(jnp.abs(out - ref)))
    assert jnp.allclose(out, ref, atol=1e-4, rtol=1e-4), err

    print("KERNEL_OK")
</pallas_src>

<mosaic_0001>
module attributes {stable_mosaic.version = 11 : i64} {
  func.func @_fcn_head_kernel(%arg0: i32, %arg1: memref<16x256xf32, #tpu.memory_space<vmem>>, %arg2: memref<16x128xf32, #tpu.memory_space<vmem>>, %arg3: memref<5x4x16xf32, #tpu.memory_space<vmem>>, %arg4: memref<4x1xf32, #tpu.memory_space<vmem>>, %arg5: memref<8x4xf32, #tpu.memory_space<vmem>>, %arg6: memref<8x256xf32, #tpu.memory_space<vmem>>) attributes {dimension_semantics = [#tpu.dimension_semantics<parallel>], iteration_bounds = array<i64: 2>, scalar_prefetch = 0 : i64, scratch_operands = 0 : i64, tpu.core_type = #tpu.core_type<tc>, window_params = [{transform_indices = @transform_0, window_bounds = array<i64: 16, 256>}, {transform_indices = @transform_1, window_bounds = array<i64: 16, 128>}, {pipeline_mode = #tpu.pipeline_mode<synchronous>, transform_indices = @transform_2, window_bounds = array<i64: 5, 4, 16>}, {pipeline_mode = #tpu.pipeline_mode<synchronous>, transform_indices = @transform_3, window_bounds = array<i64: 4, 1>}, {pipeline_mode = #tpu.pipeline_mode<synchronous>, transform_indices = @transform_4, window_bounds = array<i64: 8, 4>}, {transform_indices = @transform_5, window_bounds = array<i64: 8, 256>}]} {
    %c0 = arith.constant 0 : index
    %c0_0 = arith.constant 0 : index
    %0 = vector.load %arg1[%c0, %c0_0] : memref<16x256xf32, #tpu.memory_space<vmem>>, vector<16x256xf32>
    %c0_1 = arith.constant 0 : index
    %c0_2 = arith.constant 0 : index
    %1 = vector.load %arg2[%c0_1, %c0_2] : memref<16x128xf32, #tpu.memory_space<vmem>>, vector<16x128xf32>
    %2 = tpu.concatenate %0, %1 in 1 : vector<16x256xf32>, vector<16x128xf32> -> vector<16x384xf32>
    %cst = arith.constant 0.000000e+00 : f32
    %3 = vector.broadcast %cst : f32 to vector<4x256xf32>
    %4 = vector.extract_strided_slice %2 {offsets = [0, 0], sizes = [16, 256], strides = [1, 1]} : vector<16x384xf32> to vector<16x256xf32>
    %c0_3 = arith.constant 0 : index
    %c0_4 = arith.constant 0 : index
    %c0_5 = arith.constant 0 : index
    %5 = vector.load %arg3[%c0_3, %c0_4, %c0_5] : memref<5x4x16xf32, #tpu.memory_space<vmem>>, vector<1x4x16xf32>
    %6 = vector.shape_cast %5 : vector<1x4x16xf32> to vector<4x16xf32>
    %cst_6 = arith.constant dense<0.000000e+00> : vector<4x256xf32>
    %7 = tpu.matmul %6, %4, %cst_6 {dimension_numbers = #tpu.dot_dimension_numbers<[1], [0], [0], [1], [0, 0, 1, 1], [], []>} : vector<4x16xf32>, vector<16x256xf32>, vector<4x256xf32> -> vector<4x256xf32>
    %8 = arith.addf %3, %7 : vector<4x256xf32>
    %9 = vector.extract_strided_slice %2 {offsets = [0, 16], sizes = [16, 256], strides = [1, 1]} : vector<16x384xf32> to vector<16x256xf32>
    %c1 = arith.constant 1 : index
    %c0_7 = arith.constant 0 : index
    %c0_8 = arith.constant 0 : index
    %10 = vector.load %arg3[%c1, %c0_7, %c0_8] : memref<5x4x16xf32, #tpu.memory_space<vmem>>, vector<1x4x16xf32>
    %11 = vector.shape_cast %10 : vector<1x4x16xf32> to vector<4x16xf32>
    %cst_9 = arith.constant dense<0.000000e+00> : vector<4x256xf32>
    %12 = tpu.matmul %11, %9, %cst_9 {dimension_numbers = #tpu.dot_dimension_numbers<[1], [0], [0], [1], [0, 0, 1, 1], [], []>} : vector<4x16xf32>, vector<16x256xf32>, vector<4x256xf32> -> vector<4x256xf32>
    %13 = arith.addf %8, %12 : vector<4x256xf32>
    %14 = vector.extract_strided_slice %2 {offsets = [0, 32], sizes = [16, 256], strides = [1, 1]} : vector<16x384xf32> to vector<16x256xf32>
    %c2 = arith.constant 2 : index
    %c0_10 = arith.constant 0 : index
    %c0_11 = arith.constant 0 : index
    %15 = vector.load %arg3[%c2, %c0_10, %c0_11] : memref<5x4x16xf32, #tpu.memory_space<vmem>>, vector<1x4x16xf32>
    %16 = vector.shape_cast %15 : vector<1x4x16xf32> to vector<4x16xf32>
    %cst_12 = arith.constant dense<0.000000e+00> : vector<4x256xf32>
    %17 = tpu.matmul %16, %14, %cst_12 {dimension_numbers = #tpu.dot_dimension_numbers<[1], [0], [0], [1], [0, 0, 1, 1], [], []>} : vector<4x16xf32>, vector<16x256xf32>, vector<4x256xf32> -> vector<4x256xf32>
    %18 = arith.addf %13, %17 : vector<4x256xf32>
    %19 = vector.extract_strided_slice %2 {offsets = [0, 48], sizes = [16, 256], strides = [1, 1]} : vector<16x384xf32> to vector<16x256xf32>
    %c3 = arith.constant 3 : index
    %c0_13 = arith.constant 0 : index
    %c0_14 = arith.constant 0 : index
    %20 = vector.load %arg3[%c3, %c0_13, %c0_14] : memref<5x4x16xf32, #tpu.memory_space<vmem>>, vector<1x4x16xf32>
    %21 = vector.shape_cast %20 : vector<1x4x16xf32> to vector<4x16xf32>
    %cst_15 = arith.constant dense<0.000000e+00> : vector<4x256xf32>
    %22 = tpu.matmul %21, %19, %cst_15 {dimension_numbers = #tpu.dot_dimension_numbers<[1], [0], [0], [1], [0, 0, 1, 1], [], []>} : vector<4x16xf32>, vector<16x256xf32>, vector<4x256xf32> -> vector<4x256xf32>
    %23 = arith.addf %18, %22 : vector<4x256xf32>
    %24 = vector.extract_strided_slice %2 {offsets = [0, 64], sizes = [16, 256], strides = [1, 1]} : vector<16x384xf32> to vector<16x256xf32>
    %c4 = arith.constant 4 : index
    %c0_16 = arith.constant 0 : index
    %c0_17 = arith.constant 0 : index
    %25 = vector.load %arg3[%c4, %c0_16, %c0_17] : memref<5x4x16xf32, #tpu.memory_space<vmem>>, vector<1x4x16xf32>
    %26 = vector.shape_cast %25 : vector<1x4x16xf32> to vector<4x16xf32>
    %cst_18 = arith.constant dense<0.000000e+00> : vector<4x256xf32>
    %27 = tpu.matmul %26, %24, %cst_18 {dimension_numbers = #tpu.dot_dimension_numbers<[1], [0], [0], [1], [0, 0, 1, 1], [], []>} : vector<4x16xf32>, vector<16x256xf32>, vector<4x256xf32> -> vector<4x256xf32>
    %28 = arith.addf %23, %27 : vector<4x256xf32>
    %c0_19 = arith.constant 0 : index
    %c0_20 = arith.constant 0 : index
    %29 = vector.load %arg4[%c0_19, %c0_20] : memref<4x1xf32, #tpu.memory_space<vmem>>, vector<4x1xf32>
    %30 = vector.broadcast %29 : vector<4x1xf32> to vector<4x256xf32>
    %31 = arith.addf %28, %30 : vector<4x256xf32>
    %cst_21 = arith.constant 0.000000e+00 : f32
    %32 = vector.broadcast %cst_21 : f32 to vector<4x256xf32>
    %33 = arith.maximumf %31, %32 : vector<4x256xf32>
    %c0_22 = arith.constant 0 : index
    %c0_23 = arith.constant 0 : index
    %34 = vector.load %arg5[%c0_22, %c0_23] : memref<8x4xf32, #tpu.memory_space<vmem>>, vector<8x4xf32>
    %cst_24 = arith.constant dense<0.000000e+00> : vector<8x256xf32>
    %35 = tpu.matmul %34, %33, %cst_24 {dimension_numbers = #tpu.dot_dimension_numbers<[1], [0], [0], [1], [0, 0, 1, 1], [], []>} : vector<8x4xf32>, vector<4x256xf32>, vector<8x256xf32> -> vector<8x256xf32>
    %c0_25 = arith.constant 0 : index
    %c0_26 = arith.constant 0 : index
    %36 = vector.load %arg6[%c0_25, %c0_26] : memref<8x256xf32, #tpu.memory_space<vmem>>, vector<8x256xf32>
    tpu.vector_store %arg6[%c0_25, %c0_26], %35 {strides = array<i32>} : memref<8x256xf32, #tpu.memory_space<vmem>>, vector<8x256xf32>,
    return
  }
  func.func @transform_0(%arg0: i32) -> (i32, i32) {
    %c0_i32 = arith.constant 0 : i32
    %c0_i32_0 = arith.constant 0 : i32
    return %c0_i32, %arg0 : i32, i32
  }
  func.func @transform_1(%arg0: i32) -> (i32, i32) {
    %c1_i32 = arith.constant 1 : i32
    %0 = arith.addi %arg0, %c1_i32 : i32
    %c2_i32 = arith.constant 2 : i32
    %1 = arith.muli %0, %c2_i32 : i32
    %c0_i32 = arith.constant 0 : i32
    %c0_i32_0 = arith.constant 0 : i32
    return %c0_i32, %1 : i32, i32
  }
  func.func @transform_2(%arg0: i32) -> (i32, i32, i32) {
    %c0_i32 = arith.constant 0 : i32
    %c0_i32_0 = arith.constant 0 : i32
    %c0_i32_1 = arith.constant 0 : i32
    %c0_i32_2 = arith.constant 0 : i32
    return %c0_i32, %c0_i32_0, %c0_i32_1 : i32, i32, i32
  }
  func.func @transform_3(%arg0: i32) -> (i32, i32) {
    %c0_i32 = arith.constant 0 : i32
    %c0_i32_0 = arith.constant 0 : i32
    %c0_i32_1 = arith.constant 0 : i32
    return %c0_i32, %c0_i32_0 : i32, i32
  }
  func.func @transform_4(%arg0: i32) -> (i32, i32) {
    %c0_i32 = arith.constant 0 : i32
    %c0_i32_0 = arith.constant 0 : i32
    %c0_i32_1 = arith.constant 0 : i32
    return %c0_i32, %c0_i32_0 : i32, i32
  }
  func.func @transform_5(%arg0: i32) -> (i32, i32) {
    %c0_i32 = arith.constant 0 : i32
    %c0_i32_0 = arith.constant 0 : i32
    return %c0_i32, %arg0 : i32, i32
  }
}

</mosaic_0001>

<llo_original>
// kernel: fcn_head_nopooling.1
$region0: #{fcn_head_nopooling.1}
  #allocation0 [shape = 'u32[]', space=smem, size = 0x4, offset = 0x4, fixed_abs, tag = 'smem constant byte address 0x4 - core index']
  #allocation1 [shape = 'u32[144,128]{1,0:T(1,128)}', space=vmem, size = 0x12000, scoped, tag = 'internal scratch']
  %s0 = inlined_call_operand.vmem [shape: f32[16,640], index: 0, kind: input, shape index: {}, may-alias: {0,1}]
  %s1 = inlined_call_operand.vmem [shape: f32[16,640], index: 1, kind: input, shape index: {}, may-alias: {0,1}]
  %s2 = inlined_call_operand.vmem [shape: f32[5,4,16], index: 2, kind: input, shape index: {}]
  %s3 = inlined_call_operand.vmem [shape: f32[4,1], index: 3, kind: input, shape index: {}]
  %s4 = inlined_call_operand.vmem [shape: f32[8,4], index: 4, kind: input, shape index: {}]
  %s5 = inlined_call_operand.vmem [shape: f32[8,512], index: 5, kind: output, shape index: {}]
  %s6 = sld [smem:[#allocation0]]
  $region157: #{fcn_head_nopooling.1} parent=0
    _
  %s8 = ssub.s32 1, %s6
  %s9 = scalar_select 0, %s8, %s6
  $region1: #{fcn_head_nopooling.1} parent=0
    #allocation2 [shape = 'u8[32768]{0}', space=vmem, size = 0x8000, scoped, tag = 'input window, operand 0']
    #allocation3 [shape = 'u8[16384]{0}', space=vmem, size = 0x4000, scoped, tag = 'input window, operand 1']
    loop: start=0, step=1, limit=4
    $region2: #{fcn_head_nopooling.1} parent=1 // loop_pre_header
      _
    $region3: #{fcn_head_nopooling.1} parent=1 // loop_header
      %s11 = sphi 0, %s15
      %p12 = scmp.ge.s32.totalorder %s11, 4
      %s21 = sphi 0, %s23
      %s24 = sphi 0, %s21
      %s25 = sphi 0, %s24
      %s41 = sphi 0, %s25
      %s51 = sphi 0, %s53
      %s54 = sphi 0, %s51
      %s55 = sphi 0, %s54
      %s71 = sphi 0, %s55
      %s75 = sphi 0, %s75
      %s77 = sphi 0, %s75
      %s78 = sphi 0, %s77
      %s92 = sphi 0, %s78
      %s96 = sphi 0, %s96
      %s98 = sphi 0, %s96
      %s99 = sphi 0, %s98
      %s113 = sphi 0, %s99
      %s117 = sphi 0, %s117
      %s119 = sphi 0, %s117
      %s120 = sphi 0, %s119
      %s134 = sphi 0, %s120
      %s140 = sphi 0, %s142
      %s143 = sphi 0, %s140
      %s144 = sphi 0, %s143
      %s160 = sphi 0, %s144
    $region4: #{fcn_head_nopooling.1} parent=1 // loop_header_branch
      %14 = sbr.rel (%p12) target = $region8
    $region5: #{fcn_head_nopooling.1} parent=1 // loop_body
      %s16 = ssub.s32 %s11, 1
      %s17 = ssub.s32 %s11, 2
      %s18 = sadd.s32 %s11, 1
      %s19 = ssub.s32 %s11, %s18
      %p20 = scmp.eq.s32.totalorder %s19, 0
      %s22 = sadd.s32 %s21, 1
      %s23 = scalar_select %p20, %s21, %s22
      %p26 = pneg %p20
      %p27 = scmp.eq.s32.totalorder %s11, 1
      %p28 = por %p26, %p27
      %p29 = scmp.ne.s32.totalorder %s21, %s24
      %p30 = scmp.eq.s32.totalorder %s11, 0
      %p31 = por %p29, %p30
      %p32 = scmp.ne.s32.totalorder %s21, %s24
      %p33 = scmp.eq.s32.totalorder %s16, 1
      %p34 = por %p32, %p33
      %p35 = scmp.ne.s32.totalorder %s24, %s25
      %p36 = scmp.eq.s32.totalorder %s16, 0
      %p37 = por %p35, %p36
      %p38 = scmp.ne.s32.totalorder %s24, %s25
      %p39 = scmp.eq.s32.totalorder %s17, 1
      %p40 = por %p38, %p39
      %p42 = scmp.ne.s32.totalorder %s25, %s41
      %p43 = scmp.eq.s32.totalorder %s17, 0
      %p44 = por %p42, %p43
      %s45 = sadd.s32 %s11, 1
      %s46 = smul.u32 %s45, 2
      %s47 = sadd.s32 %s18, 1
      %s48 = smul.u32 %s47, 2
      %s49 = ssub.s32 %s46, %s48
      %p50 = scmp.eq.s32.totalorder %s49, 0
      %s52 = sadd.s32 %s51, 1
      %s53 = scalar_select %p50, %s51, %s52
      %p56 = pneg %p50
      %p57 = scmp.eq.s32.totalorder %s11, 1
      %p58 = por %p56, %p57
      %p59 = scmp.ne.s32.totalorder %s51, %s54
      %p60 = scmp.eq.s32.totalorder %s11, 0
      %p61 = por %p59, %p60
      %p62 = scmp.ne.s32.totalorder %s51, %s54
      %p63 = scmp.eq.s32.totalorder %s16, 1
      %p64 = por %p62, %p63
      %p65 = scmp.ne.s32.totalorder %s54, %s55
      %p66 = scmp.eq.s32.totalorder %s16, 0
      %p67 = por %p65, %p66
      %p68 = scmp.ne.s32.totalorder %s54, %s55
      %p69 = scmp.eq.s32.totalorder %s17, 1
      %p70 = por %p68, %p69
      %p72 = scmp.ne.s32.totalorder %s55, %s71
      %p73 = scmp.eq.s32.totalorder %s17, 0
      %p74 = por %p72, %p73
      %s76 = sadd.s32 %s75, 1
      %p79 = scmp.eq.s32.totalorder %s11, 1
      %p80 = scmp.ne.s32.totalorder %s75, %s77
      %p81 = scmp.eq.s32.totalorder %s11, 0
      %p82 = por %p80, %p81
      %p83 = scmp.ne.s32.totalorder %s75, %s77
      %p84 = scmp.eq.s32.totalorder %s16, 1
      %p85 = por %p83, %p84
      %p86 = scmp.ne.s32.totalorder %s77, %s78
      %p87 = scmp.eq.s32.totalorder %s16, 0
      %p88 = por %p86, %p87
      %p89 = scmp.ne.s32.totalorder %s77, %s78
      %p90 = scmp.eq.s32.totalorder %s17, 1
      %p91 = por %p89, %p90
      %p93 = scmp.ne.s32.totalorder %s78, %s92
      %p94 = scmp.eq.s32.totalorder %s17, 0
      %p95 = por %p93, %p94
      %s97 = sadd.s32 %s96, 1
      %p100 = scmp.eq.s32.totalorder %s11, 1
      %p101 = scmp.ne.s32.totalorder %s96, %s98
      %p102 = scmp.eq.s32.totalorder %s11, 0
      %p103 = por %p101, %p102
      %p104 = scmp.ne.s32.totalorder %s96, %s98
      %p105 = scmp.eq.s32.totalorder %s16, 1
      %p106 = por %p104, %p105
      %p107 = scmp.ne.s32.totalorder %s98, %s99
      %p108 = scmp.eq.s32.totalorder %s16, 0
      %p109 = por %p107, %p108
      %p110 = scmp.ne.s32.totalorder %s98, %s99
      %p111 = scmp.eq.s32.totalorder %s17, 1
      %p112 = por %p110, %p111
      %p114 = scmp.ne.s32.totalorder %s99, %s113
      %p115 = scmp.eq.s32.totalorder %s17, 0
      %p116 = por %p114, %p115
      %s118 = sadd.s32 %s117, 1
      %p121 = scmp.eq.s32.totalorder %s11, 1
      %p122 = scmp.ne.s32.totalorder %s117, %s119
      %p123 = scmp.eq.s32.totalorder %s11, 0
      %p124 = por %p122, %p123
      %p125 = scmp.ne.s32.totalorder %s117, %s119
      %p126 = scmp.eq.s32.totalorder %s16, 1
      %p127 = por %p125, %p126
      %p128 = scmp.ne.s32.totalorder %s119, %s120
      %p129 = scmp.eq.s32.totalorder %s16, 0
      %p130 = por %p128, %p129
      %p131 = scmp.ne.s32.totalorder %s119, %s120
      %p132 = scmp.eq.s32.totalorder %s17, 1
      %p133 = por %p131, %p132
      %p135 = scmp.ne.s32.totalorder %s120, %s134
      %p136 = scmp.eq.s32.totalorder %s17, 0
      %p137 = por %p135, %p136
      %s138 = ssub.s32 %s11, %s18
      %p139 = scmp.eq.s32.totalorder %s138, 0
      %s141 = sadd.s32 %s140, 1
      %s142 = scalar_select %p139, %s140, %s141
      %p145 = pneg %p139
      %p146 = scmp.eq.s32.totalorder %s11, 1
      %p147 = por %p145, %p146
      %p148 = scmp.ne.s32.totalorder %s140, %s143
      %p149 = scmp.eq.s32.totalorder %s11, 0
      %p150 = por %p148, %p149
      %p151 = scmp.ne.s32.totalorder %s140, %s143
      %p152 = scmp.eq.s32.totalorder %s16, 1
      %p153 = por %p151, %p152
      %p154 = scmp.ne.s32.totalorder %s143, %s144
      %p155 = scmp.eq.s32.totalorder %s16, 0
      %p156 = por %p154, %p155
      %p157 = scmp.ne.s32.totalorder %s143, %s144
      %p158 = scmp.eq.s32.totalorder %s17, 1
      %p159 = por %p157, %p158
      %p161 = scmp.ne.s32.totalorder %s144, %s160
      %p162 = scmp.eq.s32.totalorder %s17, 0
      %p163 = por %p161, %p162
      %p164 = scmp.le.s32.totalorder 1, %s11
      %p165 = scmp.lt.s32.totalorder %s11, 3
      %p166 = pnand %p164, %p165
      %p167 = pneg %p166
      // Predicated region
      $region9: #{fcn_head_nopooling.1} parent=5 // pred_check
        _
      $region10: #{fcn_head_nopooling.1} parent=5 // pred_check_branch
        %169 = sbr.rel (%p166) target = $region12
      $region11: #{fcn_head_nopooling.1} parent=5 // pred_region
        %s170 = ssub.s32 %s11, 1
        // Predicated region
        $region13: #{fcn_head_nopooling.1} parent=11 // pred_check
          %p171 = pneg %p88
        $region14: #{fcn_head_nopooling.1} parent=11 // pred_check_branch
          %173 = sbr.rel (%p171) target = $region16
        $region15: #{fcn_head_nopooling.1} parent=11 // pred_region
          _
        $region16: #{fcn_head_nopooling.1} parent=11 // pred_fallthru
          _
        // Predicated region
        $region17: #{fcn_head_nopooling.1} parent=11 // pred_check
          %p174 = pneg %p109
        $region18: #{fcn_head_nopooling.1} parent=11 // pred_check_branch
          %176 = sbr.rel (%p174) target = $region20
        $region19: #{fcn_head_nopooling.1} parent=11 // pred_region
          _
        $region20: #{fcn_head_nopooling.1} parent=11 // pred_fallthru
          _
        // Predicated region
        $region21: #{fcn_head_nopooling.1} parent=11 // pred_check
          %p177 = pneg %p130
        $region22: #{fcn_head_nopooling.1} parent=11 // pred_check_branch
          %179 = sbr.rel (%p177) target = $region24
        $region23: #{fcn_head_nopooling.1} parent=11 // pred_region
          _
        $region24: #{fcn_head_nopooling.1} parent=11 // pred_fallthru
          _
      $region12: #{fcn_head_nopooling.1} parent=5 // pred_fallthru
        _
      %p180 = scmp.lt.s32.totalorder %s11, 2
      // Predicated region
      $region25: #{fcn_head_nopooling.1} parent=5 // pred_check
        %p181 = pneg %p180
      $region26: #{fcn_head_nopooling.1} parent=5 // pred_check_branch
        %183 = sbr.rel (%p181) target = $region28
      $region27: #{fcn_head_nopooling.1} parent=5 // pred_region
        // Predicated region
        $region29: #{fcn_head_nopooling.1} parent=27 // pred_check
          %p184 = pneg %p31
        $region30: #{fcn_head_nopooling.1} parent=27 // pred_check_branch
          %186 = sbr.rel (%p184) target = $region32
        $region31: #{fcn_head_nopooling.1} parent=27 // pred_region
          %s187 = sand.u32 %s21, 1
          %s188 = sand.u32 %s21, 1
          %s189 = smul.addr %s188, 32
          %s190 = scalar_lea.vmem [#allocation2], %s189
          %s191 = smul.u32 2, %s11
          %s192 = ssub.s32 5, %s191
          %p193 = scmp.lt.s32.totalorder %s192, 2
          %s194 = scalar_select %p193, %s192, 2
          %s195 = smul.u32 256, %s194
          %p196 = scmp.ne.s32.totalorder 0, %s195
          %s197 = smul.addr %s191, 8
          %s198 = scalar_lea.vmem %s0, %s197
          %s199 = smul.u32 %s194, 8
          // Predicated region
          $region33: #{fcn_head_nopooling.1} parent=31 // pred_check
            %p200 = pneg %p196
          $region34: #{fcn_head_nopooling.1} parent=31 // pred_check_branch
            %202 = sbr.rel (%p200) target = $region36
          $region35: #{fcn_head_nopooling.1} parent=31 // pred_region
            %p203 = scmp.lt.u32.totalorder %s199, 8
            %p204 = pneg %p203
            // Predicated region
            $region37: #{fcn_head_nopooling.1} parent=35 // pred_check
              _
            $region38: #{fcn_head_nopooling.1} parent=35 // pred_check_branch
              %206 = sbr.rel (%p203) target = $region40
            $region39: #{fcn_head_nopooling.1} parent=35 // pred_region
              %s224 = sand.u32 %s199, 7
              %p225 = scmp.eq.s32.totalorder %s224, 0
              // Predicated region
              $region52: #{fcn_head_nopooling.1} parent=39 // pred_check
                %p226 = pneg %p225
              $region53: #{fcn_head_nopooling.1} parent=39 // pred_check_branch
                %228 = sbr.rel (%p226) target = $region55
              $region54: #{fcn_head_nopooling.1} parent=39 // pred_region
                %s229 = sshrl.u32 %s199, 3
                %s230 = sshrl.u32 %s229, 5
                // While loop
                $region56: #{fcn_head_nopooling.1} parent=54 // loop_pre_header
                  _
                $region57: #{fcn_head_nopooling.1} parent=54 // loop_header
                  %s234 = sphi 0, %s236
                  %p235 = scmp.ge.s32.totalorder %s234, %s230
                  %s239 = sphi 0, %s372
                  %s240 = sphi %s198, %s375
                  %s241 = sphi %s190, %s376
                $region58: #{fcn_head_nopooling.1} parent=54 // loop_header_branch
                  %238 = sbr.rel (%p235) target = $region62
                $region59: #{fcn_head_nopooling.1} parent=54 // loop_body
                  %v242 = vld [vmem:[%s240] sm:$0xff]
                  %243 = vst [vmem:[%s241] sm:$0xff] %v242
                  %v244 = vld [vmem:[%s240 + $0x8] sm:$0xff]
                  %245 = vst [vmem:[%s241 + $0x8] sm:$0xff] %v244
                  %v246 = vld [vmem:[%s240 + $0x10] sm:$0xff]
                  %247 = vst [vmem:[%s241 + $0x10] sm:$0xff] %v246
                  %v248 = vld [vmem:[%s240 + $0x18] sm:$0xff]
                  %249 = vst [vmem:[%s241 + $0x18] sm:$0xff] %v248
                  %v250 = vld [vmem:[%s240 + $0x20] sm:$0xff]
                  %251 = vst [vmem:[%s241 + $0x20] sm:$0xff] %v250
                  %v252 = vld [vmem:[%s240 + $0x28] sm:$0xff]
                  %253 = vst [vmem:[%s241 + $0x28] sm:$0xff] %v252
                  %v254 = vld [vmem:[%s240 + $0x30] sm:$0xff]
                  %255 = vst [vmem:[%s241 + $0x30] sm:$0xff] %v254
                  %v256 = vld [vmem:[%s240 + $0x38] sm:$0xff]
                  %257 = vst [vmem:[%s241 + $0x38] sm:$0xff] %v256
                  %v258 = vld [vmem:[%s240 + $0x40] sm:$0xff]
                  %259 = vst [vmem:[%s241 + $0x40] sm:$0xff] %v258
                  %v260 = vld [vmem:[%s240 + $0x48] sm:$0xff]
                  %261 = vst [vmem:[%s241 + $0x48] sm:$0xff] %v260
                  %v262 = vld [vmem:[%s240 + $0x50] sm:$0xff]
                  %263 = vst [vmem:[%s241 + $0x50] sm:$0xff] %v262
                  %v264 = vld [vmem:[%s240 + $0x58] sm:$0xff]
                  %265 = vst [vmem:[%s241 + $0x58] sm:$0xff] %v264
                  %v266 = vld [vmem:[%s240 + $0x60] sm:$0xff]
                  %267 = vst [vmem:[%s241 + $0x60] sm:$0xff] %v266
                  %v268 = vld [vmem:[%s240 + $0x68] sm:$0xff]
                  %269 = vst [vmem:[%s241 + $0x68] sm:$0xff] %v268
                  %v270 = vld [vmem:[%s240 + $0x70] sm:$0xff]
                  %271 = vst [vmem:[%s241 + $0x70] sm:$0xff] %v270
                  %v272 = vld [vmem:[%s240 + $0x78] sm:$0xff]
                  %273 = vst [vmem:[%s241 + $0x78] sm:$0xff] %v272
                  %v274 = vld [vmem:[%s240 + $0x80] sm:$0xff]
                  %275 = vst [vmem:[%s241 + $0x80] sm:$0xff] %v274
                  %v276 = vld [vmem:[%s240 + $0x88] sm:$0xff]
                  %277 = vst [vmem:[%s241 + $0x88] sm:$0xff] %v276
                  %v278 = vld [vmem:[%s240 + $0x90] sm:$0xff]
                  %279 = vst [vmem:[%s241 + $0x90] sm:$0xff] %v278
                  %v280 = vld [vmem:[%s240 + $0x98] sm:$0xff]
                  %281 = vst [vmem:[%s241 + $0x98] sm:$0xff] %v280
                  %v282 = vld [vmem:[%s240 + $0xa0] sm:$0xff]
                  %283 = vst [vmem:[%s241 + $0xa0] sm:$0xff] %v282
                  %v284 = vld [vmem:[%s240 + $0xa8] sm:$0xff]
                  %285 = vst [vmem:[%s241 + $0xa8] sm:$0xff] %v284
                  %v286 = vld [vmem:[%s240 + $0xb0] sm:$0xff]
                  %287 = vst [vmem:[%s241 + $0xb0] sm:$0xff] %v286
                  %v288 = vld [vmem:[%s240 + $0xb8] sm:$0xff]
                  %289 = vst [vmem:[%s241 + $0xb8] sm:$0xff] %v288
                  %v290 = vld [vmem:[%s240 + $0xc0] sm:$0xff]
                  %291 = vst [vmem:[%s241 + $0xc0] sm:$0xff] %v290
                  %v292 = vld [vmem:[%s240 + $0xc8] sm:$0xff]
                  %293 = vst [vmem:[%s241 + $0xc8] sm:$0xff] %v292
                  %v294 = vld [vmem:[%s240 + $0xd0] sm:$0xff]
                  %295 = vst [vmem:[%s241 + $0xd0] sm:$0xff] %v294
                  %v296 = vld [vmem:[%s240 + $0xd8] sm:$0xff]
                  %297 = vst [vmem:[%s241 + $0xd8] sm:$0xff] %v296
                  %v298 = vld [vmem:[%s240 + $0xe0] sm:$0xff]
                  %299 = vst [vmem:[%s241 + $0xe0] sm:$0xff] %v298
                  %v300 = vld [vmem:[%s240 + $0xe8] sm:$0xff]
                  %301 = vst [vmem:[%s241 + $0xe8] sm:$0xff] %v300
                  %v302 = vld [vmem:[%s240 + $0xf0] sm:$0xff]
                  %303 = vst [vmem:[%s241 + $0xf0] sm:$0xff] %v302
                  %v304 = vld [vmem:[%s240 + $0xf8] sm:$0xff]
                  %305 = vst [vmem:[%s241 + $0xf8] sm:$0xff] %v304
                  %v306 = vld [vmem:[%s240 + $0x28] sm:$0xff]
                  %307 = vst [vmem:[%s241 + $0x10] sm:$0xff] %v306
                  %v308 = vld [vmem:[%s240 + $0x30] sm:$0xff]
                  %309 = vst [vmem:[%s241 + $0x18] sm:$0xff] %v308
                  %v310 = vld [vmem:[%s240 + $0x38] sm:$0xff]
                  %311 = vst [vmem:[%s241 + $0x20] sm:$0xff] %v310
                  %v312 = vld [vmem:[%s240 + $0x40] sm:$0xff]
                  %313 = vst [vmem:[%s241 + $0x28] sm:$0xff] %v312
                  %v314 = vld [vmem:[%s240 + $0x48] sm:$0xff]
                  %315 = vst [vmem:[%s241 + $0x30] sm:$0xff] %v314
                  %v316 = vld [vmem:[%s240 + $0x50] sm:$0xff]
                  %317 = vst [vmem:[%s241 + $0x38] sm:$0xff] %v316
                  %v318 = vld [vmem:[%s240 + $0x58] sm:$0xff]
                  %319 = vst [vmem:[%s241 + $0x40] sm:$0xff] %v318
                  %v320 = vld [vmem:[%s240 + $0x60] sm:$0xff]
                  %321 = vst [vmem:[%s241 + $0x48] sm:$0xff] %v320
                  %v322 = vld [vmem:[%s240 + $0x68] sm:$0xff]
                  %323 = vst [vmem:[%s241 + $0x50] sm:$0xff] %v322
                  %v324 = vld [vmem:[%s240 + $0x70] sm:$0xff]
                  %325 = vst [vmem:[%s241 + $0x58] sm:$0xff] %v324
                  %v326 = vld [vmem:[%s240 + $0x78] sm:$0xff]
                  %327 = vst [vmem:[%s241 + $0x60] sm:$0xff] %v326
                  %v328 = vld [vmem:[%s240 + $0x80] sm:$0xff]
                  %329 = vst [vmem:[%s241 + $0x68] sm:$0xff] %v328
                  %v330 = vld [vmem:[%s240 + $0x88] sm:$0xff]
                  %331 = vst [vmem:[%s241 + $0x70] sm:$0xff] %v330
                  %v332 = vld [vmem:[%s240 + $0x90] sm:$0xff]
                  %333 = vst [vmem:[%s241 + $0x78] sm:$0xff] %v332
                  %v334 = vld [vmem:[%s240 + $0x98] sm:$0xff]
                  %335 = vst [vmem:[%s241 + $0x80] sm:$0xff] %v334
                  %v336 = vld [vmem:[%s240 + $0xa0] sm:$0xff]
                  %337 = vst [vmem:[%s241 + $0x88] sm:$0xff] %v336
                  %v338 = vld [vmem:[%s240 + $0xa8] sm:$0xff]
                  %339 = vst [vmem:[%s241 + $0x90] sm:$0xff] %v338
                  %v340 = vld [vmem:[%s240 + $0xb0] sm:$0xff]
                  %341 = vst [vmem:[%s241 + $0x98] sm:$0xff] %v340
                  %v342 = vld [vmem:[%s240 + $0xb8] sm:$0xff]
                  %343 = vst [vmem:[%s241 + $0xa0] sm:$0xff] %v342
                  %v344 = vld [vmem:[%s240 + $0xc0] sm:$0xff]
                  %345 = vst [vmem:[%s241 + $0xa8] sm:$0xff] %v344
                  %v346 = vld [vmem:[%s240 + $0xc8] sm:$0xff]
                  %347 = vst [vmem:[%s241 + $0xb0] sm:$0xff] %v346
                  %v348 = vld [vmem:[%s240 + $0xd0] sm:$0xff]
                  %349 = vst [vmem:[%s241 + $0xb8] sm:$0xff] %v348
                  %v350 = vld [vmem:[%s240 + $0xd8] sm:$0xff]
                  %351 = vst [vmem:[%s241 + $0xc0] sm:$0xff] %v350
                  %v352 = vld [vmem:[%s240 + $0xe0] sm:$0xff]
                  %353 = vst [vmem:[%s241 + $0xc8] sm:$0xff] %v352
                  %v354 = vld [vmem:[%s240 + $0xe8] sm:$0xff]
                  %355 = vst [vmem:[%s241 + $0xd0] sm:$0xff] %v354
                  %v356 = vld [vmem:[%s240 + $0xf0] sm:$0xff]
                  %357 = vst [vmem:[%s241 + $0xd8] sm:$0xff] %v356
                  %v358 = vld [vmem:[%s240 + $0xf8] sm:$0xff]
                  %359 = vst [vmem:[%s241 + $0xe0] sm:$0xff] %v358
                  %v360 = vld [vmem:[%s240 + $0x100] sm:$0xff]
                  %361 = vst [vmem:[%s241 + $0xe8] sm:$0xff] %v360
                  %v362 = vld [vmem:[%s240 + $0x108] sm:$0xff]
                  %363 = vst [vmem:[%s241 + $0xf0] sm:$0xff] %v362
                  %v364 = vld [vmem:[%s240 + $0x110] sm:$0xff]
                  %365 = vst [vmem:[%s241 + $0xf8] sm:$0xff] %v364
                  %v366 = vld [vmem:[%s240 + $0x118] sm:$0xff]
                  %367 = vst [vmem:[%s241 + $0x100] sm:$0xff] %v366
                  %v368 = vld [vmem:[%s240 + $0x120] sm:$0xff]
                  %369 = vst [vmem:[%s241 + $0x108] sm:$0xff] %v368
                  %s370 = sadd.s32 1, %s239
                  %p371 = scmp.ge.s32.totalorder %s370, %s230
                  %s372 = scalar_select %p371, 0, %s370
                  %s373 = smul.u32 %s372, 256
                  %s374 = smul.u32 %s372, 256
                  %s375 = scalar_lea.vmem %s198, %s373
                  %s376 = scalar_lea.vmem %s190, %s374 [#allocation2]
                $region60: #{fcn_head_nopooling.1} parent=54 // loop_footer
                  %s236 = sadd.s32 %s234, 1
                $region61: #{fcn_head_nopooling.1} parent=54 // loop_footer_branch
                  %233 = sbr.rel target = $region57
                $region62: #{fcn_head_nopooling.1} parent=54 // loop_exit
                  _
                %s377 = sshrl.u32 %s229, 5
                %s378 = sand.u32 %s229, 31
                %s379 = smul.u32 %s377, 32
                %s380 = smul.u32 128, %s379
                %s381 = sshra.s32 %s380, 4
                %s382 = scalar_lea.vmem %s198, %s381
                %s383 = smul.u32 128, %s379
                %s384 = sshra.s32 %s383, 4
                %s385 = scalar_lea.vmem %s190, %s384 [#allocation2]
                // While loop
                $region63: #{fcn_head_nopooling.1} parent=54 // loop_pre_header
                  _
                $region64: #{fcn_head_nopooling.1} parent=54 // loop_header
                  %s389 = sphi 0, %s391
                  %p390 = scmp.ge.s32.totalorder %s389, %s378
                  %s394 = sphi 0, %s403
                  %s395 = sphi %s382, %s406
                  %s396 = sphi %s385, %s407
                $region65: #{fcn_head_nopooling.1} parent=54 // loop_header_branch
                  %393 = sbr.rel (%p390) target = $region69
                $region66: #{fcn_head_nopooling.1} parent=54 // loop_body
                  %v397 = vld [vmem:[%s395] sm:$0xff]
                  %398 = vst [vmem:[%s396] sm:$0xff] %v397
                  %v399 = vld [vmem:[%s395 + $0x28] sm:$0xff]
                  %400 = vst [vmem:[%s396 + $0x10] sm:$0xff] %v399
                  %s401 = sadd.s32 1, %s394
                  %p402 = scmp.ge.s32.totalorder %s401, %s378
                  %s403 = scalar_select %p402, 0, %s401
                  %s404 = smul.u32 %s403, 8
                  %s405 = smul.u32 %s403, 8
                  %s406 = scalar_lea.vmem %s382, %s404
                  %s407 = scalar_lea.vmem %s385, %s405 [#allocation2]
                $region67: #{fcn_head_nopooling.1} parent=54 // loop_footer
                  %s391 = sadd.s32 %s389, 1
                $region68: #{fcn_head_nopooling.1} parent=54 // loop_footer_branch
                  %388 = sbr.rel target = $region64
                $region69: #{fcn_head_nopooling.1} parent=54 // loop_exit
                  _
              $region55: #{fcn_head_nopooling.1} parent=39 // pred_fallthru
                _
              %p408 = pneg %p225
              // Predicated region
              $region70: #{fcn_head_nopooling.1} parent=39 // pred_check
                _
              $region71: #{fcn_head_nopooling.1} parent=39 // pred_check_branch
                %410 = sbr.rel (%p225) target = $region73
              $region72: #{fcn_head_nopooling.1} parent=39 // pred_region
                %s411 = sand.u32 %s199, 7
                %s412 = ssub.s32 %s199, %s411
                %s413 = scalar_lea.vmem %s198, %s412
                %s414 = ssub.s32 %s199, %s411
                %s415 = scalar_lea.vmem %s190, %s414 [#allocation2]
                %s416 = sshrl.u32 %s199, 3
                %s417 = sshrl.u32 %s416, 5
                // While loop
                $region74: #{fcn_head_nopooling.1} parent=72 // loop_pre_header
                  _
                $region75: #{fcn_head_nopooling.1} parent=72 // loop_header
                  %s421 = sphi 0, %s423
                  %p422 = scmp.ge.s32.totalorder %s421, %s417
                  %s426 = sphi 0, %s559
                  %s427 = sphi %s198, %s562
                  %s428 = sphi %s190, %s563
                $region76: #{fcn_head_nopooling.1} parent=72 // loop_header_branch
                  %425 = sbr.rel (%p422) target = $region80
                $region77: #{fcn_head_nopooling.1} parent=72 // loop_body
                  %v429 = vld [vmem:[%s427] sm:$0xff]
                  %430 = vst [vmem:[%s428] sm:$0xff] %v429
                  %v431 = vld [vmem:[%s427 + $0x8] sm:$0xff]
                  %432 = vst [vmem:[%s428 + $0x8] sm:$0xff] %v431
                  %v433 = vld [vmem:[%s427 + $0x10] sm:$0xff]
                  %434 = vst [vmem:[%s428 + $0x10] sm:$0xff] %v433
                  %v435 = vld [vmem:[%s427 + $0x18] sm:$0xff]
                  %436 = vst [vmem:[%s428 + $0x18] sm:$0xff] %v435
                  %v437 = vld [vmem:[%s427 + $0x20] sm:$0xff]
                  %438 = vst [vmem:[%s428 + $0x20] sm:$0xff] %v437
                  %v439 = vld [vmem:[%s427 + $0x28] sm:$0xff]
                  %440 = vst [vmem:[%s428 + $0x28] sm:$0xff] %v439
                  %v441 = vld [vmem:[%s427 + $0x30] sm:$0xff]
                  %442 = vst [vmem:[%s428 + $0x30] sm:$0xff] %v441
                  %v443 = vld [vmem:[%s427 + $0x38] sm:$0xff]
                  %444 = vst [vmem:[%s428 + $0x38] sm:$0xff] %v443
                  %v445 = vld [vmem:[%s427 + $0x40] sm:$0xff]
                  %446 = vst [vmem:[%s428 + $0x40] sm:$0xff] %v445
                  %v447 = vld [vmem:[%s427 + $0x48] sm:$0xff]
                  %448 = vst [vmem:[%s428 + $0x48] sm:$0xff] %v447
                  %v449 = vld [vmem:[%s427 + $0x50] sm:$0xff]
                  %450 = vst [vmem:[%s428 + $0x50] sm:$0xff] %v449
                  %v451 = vld [vmem:[%s427 + $0x58] sm:$0xff]
                  %452 = vst [vmem:[%s428 + $0x58] sm:$0xff] %v451
                  %v453 = vld [vmem:[%s427 + $0x60] sm:$0xff]
                  %454 = vst [vmem:[%s428 + $0x60] sm:$0xff] %v453
                  %v455 = vld [vmem:[%s427 + $0x68] sm:$0xff]
                  %456 = vst [vmem:[%s428 + $0x68] sm:$0xff] %v455
                  %v457 = vld [vmem:[%s427 + $0x70] sm:$0xff]
                  %458 = vst [vmem:[%s428 + $0x70] sm:$0xff] %v457
                  %v459 = vld [vmem:[%s427 + $0x78] sm:$0xff]
                  %460 = vst [vmem:[%s428 + $0x78] sm:$0xff] %v459
                  %v461 = vld [vmem:[%s427 + $0x80] sm:$0xff]
                  %462 = vst [vmem:[%s428 + $0x80] sm:$0xff] %v461
                  %v463 = vld [vmem:[%s427 + $0x88] sm:$0xff]
                  %464 = vst [vmem:[%s428 + $0x88] sm:$0xff] %v463
                  %v465 = vld [vmem:[%s427 + $0x90] sm:$0xff]
                  %466 = vst [vmem:[%s428 + $0x90] sm:$0xff] %v465
                  %v467 = vld [vmem:[%s427 + $0x98] sm:$0xff]
                  %468 = vst [vmem:[%s428 + $0x98] sm:$0xff] %v467
                  %v469 = vld [vmem:[%s427 + $0xa0] sm:$0xff]
                  %470 = vst [vmem:[%s428 + $0xa0] sm:$0xff] %v469
                  %v471 = vld [vmem:[%s427 + $0xa8] sm:$0xff]
                  %472 = vst [vmem:[%s428 + $0xa8] sm:$0xff] %v471
                  %v473 = vld [vmem:[%s427 + $0xb0] sm:$0xff]
                  %474 = vst [vmem:[%s428 + $0xb0] sm:$0xff] %v473
                  %v475 = vld [vmem:[%s427 + $0xb8] sm:$0xff]
                  %476 = vst [vmem:[%s428 + $0xb8] sm:$0xff] %v475
                  %v477 = vld [vmem:[%s427 + $0xc0] sm:$0xff]
                  %478 = vst [vmem:[%s428 + $0xc0] sm:$0xff] %v477
                  %v479 = vld [vmem:[%s427 + $0xc8] sm:$0xff]
                  %480 = vst [vmem:[%s428 + $0xc8] sm:$0xff] %v479
                  %v481 = vld [vmem:[%s427 + $0xd0] sm:$0xff]
                  %482 = vst [vmem:[%s428 + $0xd0] sm:$0xff] %v481
                  %v483 = vld [vmem:[%s427 + $0xd8] sm:$0xff]
                  %484 = vst [vmem:[%s428 + $0xd8] sm:$0xff] %v483
                  %v485 = vld [vmem:[%s427 + $0xe0] sm:$0xff]
                  %486 = vst [vmem:[%s428 + $0xe0] sm:$0xff] %v485
                  %v487 = vld [vmem:[%s427 + $0xe8] sm:$0xff]
                  %488 = vst [vmem:[%s428 + $0xe8] sm:$0xff] %v487
                  %v489 = vld [vmem:[%s427 + $0xf0] sm:$0xff]
                  %490 = vst [vmem:[%s428 + $0xf0] sm:$0xff] %v489
                  %v491 = vld [vmem:[%s427 + $0xf8] sm:$0xff]
                  %492 = vst [vmem:[%s428 + $0xf8] sm:$0xff] %v491
                  %v493 = vld [vmem:[%s427 + $0x28] sm:$0xff]
                  %494 = vst [vmem:[%s428 + $0x10] sm:$0xff] %v493
                  %v495 = vld [vmem:[%s427 + $0x30] sm:$0xff]
                  %496 = vst [vmem:[%s428 + $0x18] sm:$0xff] %v495
                  %v497 = vld [vmem:[%s427 + $0x38] sm:$0xff]
                  %498 = vst [vmem:[%s428 + $0x20] sm:$0xff] %v497
                  %v499 = vld [vmem:[%s427 + $0x40] sm:$0xff]
                  %500 = vst [vmem:[%s428 + $0x28] sm:$0xff] %v499
                  %v501 = vld [vmem:[%s427 + $0x48] sm:$0xff]
                  %502 = vst [vmem:[%s428 + $0x30] sm:$0xff] %v501
                  %v503 = vld [vmem:[%s427 + $0x50] sm:$0xff]
                  %504 = vst [vmem:[%s428 + $0x38] sm:$0xff] %v503
                  %v505 = vld [vmem:[%s427 + $0x58] sm:$0xff]
                  %506 = vst [vmem:[%s428 + $0x40] sm:$0xff] %v505
                  %v507 = vld [vmem:[%s427 + $0x60] sm:$0xff]
                  %508 = vst [vmem:[%s428 + $0x48] sm:$0xff] %v507
                  %v509 = vld [vmem:[%s427 + $0x68] sm:$0xff]
                  %510 = vst [vmem:[%s428 + $0x50] sm:$0xff] %v509
                  %v511 = vld [vmem:[%s427 + $0x70] sm:$0xff]
                  %512 = vst [vmem:[%s428 + $0x58] sm:$0xff] %v511
                  %v513 = vld [vmem:[%s427 + $0x78] sm:$0xff]
                  %514 = vst [vmem:[%s428 + $0x60] sm:$0xff] %v513
                  %v515 = vld [vmem:[%s427 + $0x80] sm:$0xff]
                  %516 = vst [vmem:[%s428 + $0x68] sm:$0xff] %v515
                  %v517 = vld [vmem:[%s427 + $0x88] sm:$0xff]
                  %518 = vst [vmem:[%s428 + $0x70] sm:$0xff] %v517
                  %v519 = vld [vmem:[%s427 + $0x90] sm:$0xff]
                  %520 = vst [vmem:[%s428 + $0x78] sm:$0xff] %v519
                  %v521 = vld [vmem:[%s427 + $0x98] sm:$0xff]
                  %522 = vst [vmem:[%s428 + $0x80] sm:$0xff] %v521
                  %v523 = vld [vmem:[%s427 + $0xa0] sm:$0xff]
                  %524 = vst [vmem:[%s428 + $0x88] sm:$0xff] %v523
                  %v525 = vld [vmem:[%s427 + $0xa8] sm:$0xff]
                  %526 = vst [vmem:[%s428 + $0x90] sm:$0xff] %v525
                  %v527 = vld [vmem:[%s427 + $0xb0] sm:$0xff]
                  %528 = vst [vmem:[%s428 + $0x98] sm:$0xff] %v527
                  %v529 = vld [vmem:[%s427 + $0xb8] sm:$0xff]
                  %530 = vst [vmem:[%s428 + $0xa0] sm:$0xff] %v529
                  %v531 = vld [vmem:[%s427 + $0xc0] sm:$0xff]
                  %532 = vst [vmem:[%s428 + $0xa8] sm:$0xff] %v531
                  %v533 = vld [vmem:[%s427 + $0xc8] sm:$0xff]
                  %534 = vst [vmem:[%s428 + $0xb0] sm:$0xff] %v533
                  %v535 = vld [vmem:[%s427 + $0xd0] sm:$0xff]
                  %536 = vst [vmem:[%s428 + $0xb8] sm:$0xff] %v535
                  %v537 = vld [vmem:[%s427 + $0xd8] sm:$0xff]
                  %538 = vst [vmem:[%s428 + $0xc0] sm:$0xff] %v537
                  %v539 = vld [vmem:[%s427 + $0xe0] sm:$0xff]
                  %540 = vst [vmem:[%s428 + $0xc8] sm:$0xff] %v539
                  %v541 = vld [vmem:[%s427 + $0xe8] sm:$0xff]
                  %542 = vst [vmem:[%s428 + $0xd0] sm:$0xff] %v541
                  %v543 = vld [vmem:[%s427 + $0xf0] sm:$0xff]
                  %544 = vst [vmem:[%s428 + $0xd8] sm:$0xff] %v543
                  %v545 = vld [vmem:[%s427 + $0xf8] sm:$0xff]
                  %546 = vst [vmem:[%s428 + $0xe0] sm:$0xff] %v545
                  %v547 = vld [vmem:[%s427 + $0x100] sm:$0xff]
                  %548 = vst [vmem:[%s428 + $0xe8] sm:$0xff] %v547
                  %v549 = vld [vmem:[%s427 + $0x108] sm:$0xff]
                  %550 = vst [vmem:[%s428 + $0xf0] sm:$0xff] %v549
                  %v551 = vld [vmem:[%s427 + $0x110] sm:$0xff]
                  %552 = vst [vmem:[%s428 + $0xf8] sm:$0xff] %v551
                  %v553 = vld [vmem:[%s427 + $0x118] sm:$0xff]
                  %554 = vst [vmem:[%s428 + $0x100] sm:$0xff] %v553
                  %v555 = vld [vmem:[%s427 + $0x120] sm:$0xff]
                  %556 = vst [vmem:[%s428 + $0x108] sm:$0xff] %v555
                  %s557 = sadd.s32 1, %s426
                  %p558 = scmp.ge.s32.totalorder %s557, %s417
                  %s559 = scalar_select %p558, 0, %s557
                  %s560 = smul.u32 %s559, 256
                  %s561 = smul.u32 %s559, 256
                  %s562 = scalar_lea.vmem %s198, %s560
                  %s563 = scalar_lea.vmem %s190, %s561 [#allocation2]
                $region78: #{fcn_head_nopooling.1} parent=72 // loop_footer
                  %s423 = sadd.s32 %s421, 1
                $region79: #{fcn_head_nopooling.1} parent=72 // loop_footer_branch
                  %420 = sbr.rel target = $region75
                $region80: #{fcn_head_nopooling.1} parent=72 // loop_exit
                  _
                %s564 = sshrl.u32 %s416, 5
                %s565 = sand.u32 %s416, 31
                %s566 = smul.u32 %s564, 32
                %s567 = smul.u32 128, %s566
                %s568 = sshra.s32 %s567, 4
                %s569 = scalar_lea.vmem %s198, %s568
                %s570 = smul.u32 128, %s566
                %s571 = sshra.s32 %s570, 4
                %s572 = scalar_lea.vmem %s190, %s571 [#allocation2]
                // While loop
                $region81: #{fcn_head_nopooling.1} parent=72 // loop_pre_header
                  _
                $region82: #{fcn_head_nopooling.1} parent=72 // loop_header
                  %s576 = sphi 0, %s578
                  %p577 = scmp.ge.s32.totalorder %s576, %s565
                  %s581 = sphi 0, %s590
                  %s582 = sphi %s569, %s593
                  %s583 = sphi %s572, %s594
                $region83: #{fcn_head_nopooling.1} parent=72 // loop_header_branch
                  %580 = sbr.rel (%p577) target = $region87
                $region84: #{fcn_head_nopooling.1} parent=72 // loop_body
                  %v584 = vld [vmem:[%s582] sm:$0xff]
                  %585 = vst [vmem:[%s583] sm:$0xff] %v584
                  %v586 = vld [vmem:[%s582 + $0x28] sm:$0xff]
                  %587 = vst [vmem:[%s583 + $0x10] sm:$0xff] %v586
                  %s588 = sadd.s32 1, %s581
                  %p589 = scmp.ge.s32.totalorder %s588, %s565
                  %s590 = scalar_select %p589, 0, %s588
                  %s591 = smul.u32 %s590, 8
                  %s592 = smul.u32 %s590, 8
                  %s593 = scalar_lea.vmem %s569, %s591
                  %s594 = scalar_lea.vmem %s572, %s592 [#allocation2]
                $region85: #{fcn_head_nopooling.1} parent=72 // loop_footer
                  %s578 = sadd.s32 %s576, 1
                $region86: #{fcn_head_nopooling.1} parent=72 // loop_footer_branch
                  %575 = sbr.rel target = $region82
                $region87: #{fcn_head_nopooling.1} parent=72 // loop_exit
                  _
                %s595 = sshll.u32 1, %s411
                %s596 = ssub.s32 %s595, 1
                loop: start=0, step=1, limit=1
                $region88: #{fcn_head_nopooling.1} parent=72 // loop_pre_header
                  _
                $region89: #{fcn_head_nopooling.1} parent=72 // loop_header
                  %s598 = sphi 0, %s602
                  %p599 = scmp.ge.s32.totalorder %s598, 1
                  %s603 = sphi %s413, %s413
                  %s604 = sphi %s415, %s415
                $region90: #{fcn_head_nopooling.1} parent=72 // loop_header_branch
                  %601 = sbr.rel (%p599) target = $region94
                $region91: #{fcn_head_nopooling.1} parent=72 // loop_body
                  %v605 = vld [vmem:[%s603] sm:%s596]
                  %606 = vst [vmem:[%s604] sm:%s596] %v605
                  %v607 = vld [vmem:[%s603 + $0x28] sm:%s596]
                  %608 = vst [vmem:[%s604 + $0x10] sm:%s596] %v607
                $region92: #{fcn_head_nopooling.1} parent=72 // loop_footer
                  %s602 = sadd.s32 1, %s598
                $region93: #{fcn_head_nopooling.1} parent=72 // loop_footer_branch
                  %597 = sbr.rel target = $region89
                $region94: #{fcn_head_nopooling.1} parent=72 // loop_exit
                  _
              $region73: #{fcn_head_nopooling.1} parent=39 // pred_fallthru
                _
            $region40: #{fcn_head_nopooling.1} parent=35 // pred_fallthru
              _
            // Predicated region
            $region41: #{fcn_head_nopooling.1} parent=35 // pred_check
              %p207 = pneg %p203
            $region42: #{fcn_head_nopooling.1} parent=35 // pred_check_branch
              %209 = sbr.rel (%p207) target = $region44
            $region43: #{fcn_head_nopooling.1} parent=35 // pred_region
              %s210 = sshll.u32 1, %s199
              %s211 = ssub.s32 %s210, 1
              loop: start=0, step=1, limit=1
              $region45: #{fcn_head_nopooling.1} parent=43 // loop_pre_header
                _
              $region46: #{fcn_head_nopooling.1} parent=43 // loop_header
                %s213 = sphi 0, %s217
                %p214 = scmp.ge.s32.totalorder %s213, 1
                %s218 = sphi %s198, %s198
                %s219 = sphi %s190, %s190
              $region47: #{fcn_head_nopooling.1} parent=43 // loop_header_branch
                %216 = sbr.rel (%p214) target = $region51
              $region48: #{fcn_head_nopooling.1} parent=43 // loop_body
                %v220 = vld [vmem:[%s218] sm:%s211]
                %221 = vst [vmem:[%s219] sm:%s211] %v220
                %v222 = vld [vmem:[%s218 + $0x28] sm:%s211]
                %223 = vst [vmem:[%s219 + $0x10] sm:%s211] %v222
              $region49: #{fcn_head_nopooling.1} parent=43 // loop_footer
                %s217 = sadd.s32 1, %s213
              $region50: #{fcn_head_nopooling.1} parent=43 // loop_footer_branch
                %212 = sbr.rel target = $region46
              $region51: #{fcn_head_nopooling.1} parent=43 // loop_exit
                _
            $region44: #{fcn_head_nopooling.1} parent=35 // pred_fallthru
              _
          $region36: #{fcn_head_nopooling.1} parent=31 // pred_fallthru
            _
          %609 = vnop
        $region32: #{fcn_head_nopooling.1} parent=27 // pred_fallthru
          _
        // Predicated region
        $region95: #{fcn_head_nopooling.1} parent=27 // pred_check
          %p610 = pneg %p61
        $region96: #{fcn_head_nopooling.1} parent=27 // pred_check_branch
          %612 = sbr.rel (%p610) target = $region98
        $region97: #{fcn_head_nopooling.1} parent=27 // pred_region
          %s613 = sand.u32 %s51, 1
          %s614 = sand.u32 %s51, 1
          %s615 = smul.addr %s614, 16
          %s616 = scalar_lea.vmem [#allocation3], %s615
          %s617 = sadd.s32 %s11, 1
          %s618 = smul.u32 %s617, 2
          %s619 = smul.addr %s618, 8
          %s620 = scalar_lea.vmem %s1, %s619
          // Predicated region
          $region99: #{fcn_head_nopooling.1} parent=97 // pred_check
            _
          $region100: #{fcn_head_nopooling.1} parent=97 // pred_check_branch
            %622 = sbr.rel (0) target = $region102
          $region101: #{fcn_head_nopooling.1} parent=97 // pred_region
            // Predicated region
            $region103: #{fcn_head_nopooling.1} parent=101 // pred_check
              _
            $region104: #{fcn_head_nopooling.1} parent=101 // pred_check_branch
              %624 = sbr.rel (0) target = $region106
            $region105: #{fcn_head_nopooling.1} parent=101 // pred_region
              // Predicated region
              $region118: #{fcn_head_nopooling.1} parent=105 // pred_check
                _
              $region119: #{fcn_head_nopooling.1} parent=105 // pred_check_branch
                %642 = sbr.rel (0) target = $region121
              $region120: #{fcn_head_nopooling.1} parent=105 // pred_region
                loop: start=0, step=1, limit=1
                $region122: #{fcn_head_nopooling.1} parent=120 // loop_pre_header
                  _
                $region123: #{fcn_head_nopooling.1} parent=120 // loop_header
                  %s644 = sphi 0, %s648
                  %p645 = scmp.ge.s32.totalorder %s644, 1
                  %s649 = sphi %s620, %s620
                  %s650 = sphi %s616, %s616
                $region124: #{fcn_head_nopooling.1} parent=120 // loop_header_branch
                  %647 = sbr.rel (%p645) target = $region128
                $region125: #{fcn_head_nopooling.1} parent=120 // loop_body
                  %v651 = vld [vmem:[%s649] sm:$0xff]
                  %652 = vst [vmem:[%s650] sm:$0xff] %v651
                  %v653 = vld [vmem:[%s649 + $0x28] sm:$0xff]
                  %654 = vst [vmem:[%s650 + $0x8] sm:$0xff] %v653
                $region126: #{fcn_head_nopooling.1} parent=120 // loop_footer
                  %s648 = sadd.s32 1, %s644
                $region127: #{fcn_head_nopooling.1} parent=120 // loop_footer_branch
                  %643 = sbr.rel target = $region123
                $region128: #{fcn_head_nopooling.1} parent=120 // loop_exit
                  _
              $region121: #{fcn_head_nopooling.1} parent=105 // pred_fallthru
                _
              // Predicated region
              $region129: #{fcn_head_nopooling.1} parent=105 // pred_check
                _
              $region130: #{fcn_head_nopooling.1} parent=105 // pred_check_branch
                %656 = sbr.rel target = $region132
              $region131: #{fcn_head_nopooling.1} parent=105 // pred_region
                _
              $region132: #{fcn_head_nopooling.1} parent=105 // pred_fallthru
                _
            $region106: #{fcn_head_nopooling.1} parent=101 // pred_fallthru
              _
            // Predicated region
            $region107: #{fcn_head_nopooling.1} parent=101 // pred_check
              _
            $region108: #{fcn_head_nopooling.1} parent=101 // pred_check_branch
              %626 = sbr.rel target = $region110
            $region109: #{fcn_head_nopooling.1} parent=101 // pred_region
              %s628 = ssub.s32 256, 1
              loop: start=0, step=1, limit=1
              $region111: #{fcn_head_nopooling.1} parent=109 // loop_pre_header
                _
              $region112: #{fcn_head_nopooling.1} parent=109 // loop_header
                %s630 = sphi 0, %s634
                %p631 = scmp.ge.s32.totalorder %s630, 1
                %s635 = sphi %s620, %s620
                %s636 = sphi %s616, %s616
              $region113: #{fcn_head_nopooling.1} parent=109 // loop_header_branch
                %633 = sbr.rel (%p631) target = $region117
              $region114: #{fcn_head_nopooling.1} parent=109 // loop_body
                %v637 = vld [vmem:[%s635] sm:%s628]
                %638 = vst [vmem:[%s636] sm:%s628] %v637
                %v639 = vld [vmem:[%s635 + $0x28] sm:%s628]
                %640 = vst [vmem:[%s636 + $0x8] sm:%s628] %v639
              $region115: #{fcn_head_nopooling.1} parent=109 // loop_footer
                %s634 = sadd.s32 1, %s630
              $region116: #{fcn_head_nopooling.1} parent=109 // loop_footer_branch
                %629 = sbr.rel target = $region112
              $region117: #{fcn_head_nopooling.1} parent=109 // loop_exit
                _
            $region110: #{fcn_head_nopooling.1} parent=101 // pred_fallthru
              _
          $region102: #{fcn_head_nopooling.1} parent=97 // pred_fallthru
            _
          %657 = vnop
        $region98: #{fcn_head_nopooling.1} parent=27 // pred_fallthru
          _
      $region28: #{fcn_head_nopooling.1} parent=5 // pred_fallthru
        _
      %p658 = scmp.le.s32.totalorder 1, %s11
      %p659 = scmp.lt.s32.totalorder %s11, 3
      %p660 = pnand %p658, %p659
      %p661 = pneg %p660
      // Predicated region
      $region133: #{fcn_head_nopooling.1} parent=5 // pred_check
        _
      $region134: #{fcn_head_nopooling.1} parent=5 // pred_check_branch
        %663 = sbr.rel (%p660) target = $region136
      $region135: #{fcn_head_nopooling.1} parent=5 // pred_region
        %s664 = ssub.s32 %s11, 1
        %s665 = sand.u32 %s24, 1
        %s666 = sand.u32 %s24, 1
        %s667 = smul.addr %s666, 32
        %s668 = scalar_lea.vmem [#allocation2], %s667
        // Predicated region
        $region137: #{fcn_head_nopooling.1} parent=135 // pred_check
          %p669 = pneg %p37
        $region138: #{fcn_head_nopooling.1} parent=135 // pred_check_branch
          %671 = sbr.rel (%p669) target = $region140
        $region139: #{fcn_head_nopooling.1} parent=135 // pred_region
          _
        $region140: #{fcn_head_nopooling.1} parent=135 // pred_fallthru
          _
        %s672 = sand.u32 %s54, 1
        %s673 = sand.u32 %s54, 1
        %s674 = smul.addr %s673, 16
        %s675 = scalar_lea.vmem [#allocation3], %s674
        // Predicated region
        $region141: #{fcn_head_nopooling.1} parent=135 // pred_check
          %p676 = pneg %p67
        $region142: #{fcn_head_nopooling.1} parent=135 // pred_check_branch
          %678 = sbr.rel (%p676) target = $region144
        $region143: #{fcn_head_nopooling.1} parent=135 // pred_region
          _
        $region144: #{fcn_head_nopooling.1} parent=135 // pred_fallthru
          _
        %s679 = sand.u32 %s24, 1
        %s680 = sand.u32 %s24, 1
        %s681 = smul.addr %s680, 32
        %s682 = scalar_lea.vmem [#allocation2], %s681
        %p683 = pneg %p37
        %p684 = pneg %p34
        %s685 = sand.u32 %s54, 1
        %s686 = sand.u32 %s54, 1
        %s687 = smul.addr %s686, 16
        %s688 = scalar_lea.vmem [#allocation3], %s687
        %p689 = pneg %p67
        %p690 = pneg %p64
        %p691 = pneg %p88
        %p692 = pneg %p85
        %p693 = pneg %p109
        %p694 = pneg %p106
        %p695 = pneg %p130
        %p696 = pneg %p127
        %p697 = pneg %p156
        %p698 = pneg %p153
        %s699 = smul.u32 2, %s16
        %p700 = scmp.lt.s32.totalorder %s699, 3
        %s701 = scalar_select %p700, %s699, 3
        %s702 = smul.addr %s701, 8
        %s703 = scalar_lea.vmem %s5, %s702
        %s704 = smul.u32 2, %s16
        %s705 = ssub.s32 5, %s704
        %p706 = scmp.lt.s32.totalorder %s705, 2
        %s707 = scalar_select %p706, %s705, 2
        %s708 = smul.u32 256, %s707
        %s709 = sadd.s32 %s16, 1
        %s710 = smul.u32 %s709, 2
        %s711 = smul.u32 2, %s16
        %p712 = scmp.lt.s32.totalorder %s711, 3
        %s713 = scalar_select %p712, %s711, 3
        %s714 = smul.addr %s713, 8
        %s715 = scalar_lea.vmem %s5, %s714
        %s716 = smul.u32 2, %s16
        %v717 = vld [vmem:[%s668] sm:$0xff]
        %v718 = vld [vmem:[%s668 + $0x8] sm:$0xff]
        %v719 = vld [vmem:[%s668 + $0x10] sm:$0xff]
        %v720 = vld [vmem:[%s668 + $0x18] sm:$0xff]
        %v721 = vld [vmem:[%s675] sm:$0xff]
        %v722 = vld [vmem:[%s675 + $0x8] sm:$0xff]
        %v723 = vld [vmem:[%s2] sm:$0xf]
        %s724 = scalar_lea.vmem %s2, 4
        %v725 = vld [vmem:[%s724] sm:$0xf]
        %732 = vrot.lane.b32.xlu0 %v717, 112
        %v733 = vpop.permute.xlu0 %732
        %734 = vrot.lane.b32.xlu0 %v718, 112
        %v735 = vpop.permute.xlu0 %734
        %736 = vrot.lane.b32.xlu0 %v721, 112
        %v737 = vpop.permute.xlu0 %736
        %738 = vrot.lane.b32.xlu0 %v719, 112
        %v739 = vpop.permute.xlu0 %738
        %740 = vrot.lane.b32.xlu0 %v720, 112
        %v741 = vpop.permute.xlu0 %740
        %742 = vrot.lane.b32.xlu0 %v722, 112
        %v743 = vpop.permute.xlu0 %742
        %vm744 = vcmask 916480
        %v745 = vsel %vm744, %v733, %v735
        %v746 = vsel %vm744, %v735, %v737
        %v747 = vsel %vm744, %v739, %v741
        %v748 = vsel %vm744, %v741, %v743
        %vm753 = vcmask 130048
        %v755 = vsel %vm753, %v725, 0
        %757 = vmatprep.subr.mxu0 0.0
        %758 = vmatpush1.msra.mxu0 0.0
        %759 = vmatprep.subr.mxu0 0.0
        %760 = vmatpush1.msra.mxu0 0.0
        %761 = vmatprep.subr.mxu0 0.0
        %762 = vmatpush1.msra.mxu0 0.0
        %763 = vmatprep.subr.mxu0 0.0
        %764 = vmatpush1.msra.mxu0 0.0
        %765 = vmatprep.subr.mxu0 0.0
        %766 = vmatpush1.msra.mxu0 0.0
        %767 = vmatprep.subr.mxu0 0.0
        %768 = vmatpush1.msra.mxu0 0.0
        %769 = vmatprep.subr.mxu0 0.0
        %770 = vmatpush1.msra.mxu0 0.0
        %771 = vmatprep.subr.mxu0 0.0
        %772 = vmatpush1.msra.mxu0 0.0
        %773 = vmatprep.subr.mxu0 0.0
        %774 = vmatpush1.msra.mxu0 0.0
        %775 = vmatprep.subr.mxu0 0.0
        %776 = vmatpush1.msra.mxu0 0.0
        %777 = vmatprep.subr.mxu0 0.0
        %778 = vmatpush1.msra.mxu0 0.0
        %779 = vmatprep.subr.mxu0 0.0
        %780 = vmatpush1.msra.mxu0 0.0
        %781 = vmatprep.subr.mxu0 0.0
        %782 = vmatpush1.msra.mxu0 0.0
        %783 = vmatprep.subr.mxu0 0.0
        %784 = vmatpush1.msra.mxu0 0.0
        %785 = vmatprep.subr.mxu0 %v748
        %786 = vmatpush1.msra.mxu0 %v747
        %787 = vmatprep.subr.mxu0 %v746
        %788 = vmatpush1.msra.mxu0 %v745
        %789 = vmatprep.subr.mxu0 0.0
        %790 = vmatpush2.msra.mxu0 0.0
        %791 = vmatprep.subr.mxu0 0.0
        %792 = vmatpush2.msra.mxu0 0.0
        %793 = vmatprep.subr.mxu0 0.0
        %794 = vmatpush2.msra.mxu0 0.0
        %795 = vmatprep.subr.mxu0 0.0
        %796 = vmatpush2.msra.mxu0 0.0
        %797 = vmatprep.subr.mxu0 0.0
        %798 = vmatpush2.msra.mxu0 0.0
        %799 = vmatprep.subr.mxu0 0.0
        %800 = vmatpush2.msra.mxu0 0.0
        %801 = vmatprep.subr.mxu0 0.0
        %802 = vmatpush2.msra.mxu0 0.0
        %803 = vmatprep.subr.mxu0 0.0
        %804 = vmatpush2.msra.mxu0 0.0
        %805 = vmatprep.subr.mxu0 0.0
        %806 = vmatpush2.msra.mxu0 0.0
        %807 = vmatprep.subr.mxu0 0.0
        %808 = vmatpush2.msra.mxu0 0.0
        %809 = vmatprep.subr.mxu0 0.0
        %810 = vmatpush2.msra.mxu0 0.0
        %811 = vmatprep.subr.mxu0 0.0
        %812 = vmatpush2.msra.mxu0 0.0
        %813 = vmatprep.subr.mxu0 0.0
        %814 = vmatpush2.msra.mxu0 0.0
        %815 = vmatprep.subr.mxu0 0.0
        %816 = vmatpush2.msra.mxu0 0.0
        %817 = vmatprep.subr.mxu0 0.0
        %818 = vmatpush2.msra.mxu0 0.0
        %819 = vmatprep.subr.mxu0 0.0
        %820 = vmatpush2.msra.mxu0 0.0
        %821 = vmatprep.mubr.f32.mxu0 0.0
        %822 = vmatmul.mubr.f32.gmra.mxu0 %v755
        %v823 = vpop.f32.mrf.mxu0
        %v824 = vadd.f32 0.0, %v823
        %v825 = vpop.f32.mrf.mxu0
        %v826 = vadd.f32 0.0, %v825
        %827 = vdwg.mxu0
        %v829 = vsel %vm753, %v723, 0
        %831 = vmatprep.subr.mxu0 0.0
        %832 = vmatpush1.msra.mxu0 0.0
        %833 = vmatprep.subr.mxu0 0.0
        %834 = vmatpush1.msra.mxu0 0.0
        %835 = vmatprep.subr.mxu0 0.0
        %836 = vmatpush1.msra.mxu0 0.0
        %837 = vmatprep.subr.mxu0 0.0
        %838 = vmatpush1.msra.mxu0 0.0
        %839 = vmatprep.subr.mxu0 0.0
        %840 = vmatpush1.msra.mxu0 0.0
        %841 = vmatprep.subr.mxu0 0.0
        %842 = vmatpush1.msra.mxu0 0.0
        %843 = vmatprep.subr.mxu0 0.0
        %844 = vmatpush1.msra.mxu0 0.0
        %845 = vmatprep.subr.mxu0 0.0
        %846 = vmatpush1.msra.mxu0 0.0
        %847 = vmatprep.subr.mxu0 0.0
        %848 = vmatpush1.msra.mxu0 0.0
        %849 = vmatprep.subr.mxu0 0.0
        %850 = vmatpush1.msra.mxu0 0.0
        %851 = vmatprep.subr.mxu0 0.0
        %852 = vmatpush1.msra.mxu0 0.0
        %853 = vmatprep.subr.mxu0 0.0
        %854 = vmatpush1.msra.mxu0 0.0
        %855 = vmatprep.subr.mxu0 0.0
        %856 = vmatpush1.msra.mxu0 0.0
        %857 = vmatprep.subr.mxu0 0.0
        %858 = vmatpush1.msra.mxu0 0.0
        %859 = vmatprep.subr.mxu0 %v720
        %860 = vmatpush1.msra.mxu0 %v719
        %861 = vmatprep.subr.mxu0 %v718
        %862 = vmatpush1.msra.mxu0 %v717
        %863 = vmatprep.subr.mxu0 0.0
        %864 = vmatpush2.msra.mxu0 0.0
        %865 = vmatprep.subr.mxu0 0.0
        %866 = vmatpush2.msra.mxu0 0.0
        %867 = vmatprep.subr.mxu0 0.0
        %868 = vmatpush2.msra.mxu0 0.0
        %869 = vmatprep.subr.mxu0 0.0
        %870 = vmatpush2.msra.mxu0 0.0
        %871 = vmatprep.subr.mxu0 0.0
        %872 = vmatpush2.msra.mxu0 0.0
        %873 = vmatprep.subr.mxu0 0.0
        %874 = vmatpush2.msra.mxu0 0.0
        %875 = vmatprep.subr.mxu0 0.0
        %876 = vmatpush2.msra.mxu0 0.0
        %877 = vmatprep.subr.mxu0 0.0
        %878 = vmatpush2.msra.mxu0 0.0
        %879 = vmatprep.subr.mxu0 0.0
        %880 = vmatpush2.msra.mxu0 0.0
        %881 = vmatprep.subr.mxu0 0.0
        %882 = vmatpush2.msra.mxu0 0.0
        %883 = vmatprep.subr.mxu0 0.0
        %884 = vmatpush2.msra.mxu0 0.0
        %885 = vmatprep.subr.mxu0 0.0
        %886 = vmatpush2.msra.mxu0 0.0
        %887 = vmatprep.subr.mxu0 0.0
        %888 = vmatpush2.msra.mxu0 0.0
        %889 = vmatprep.subr.mxu0 0.0
        %890 = vmatpush2.msra.mxu0 0.0
        %891 = vmatprep.subr.mxu0 0.0
        %892 = vmatpush2.msra.mxu0 0.0
        %893 = vmatprep.subr.mxu0 0.0
        %894 = vmatpush2.msra.mxu0 0.0
        %895 = vmatprep.mubr.f32.mxu0 0.0
        %896 = vmatmul.mubr.f32.gmra.mxu0 %v829
        %v897 = vpop.f32.mrf.mxu0
        %v898 = vadd.f32 %v824, %v897
        %v899 = vpop.f32.mrf.mxu0
        %v900 = vadd.f32 %v826, %v899
        %901 = vdwg.mxu0
        %s902 = scalar_lea.vmem %s2, 8
        %v903 = vld [vmem:[%s902] sm:$0xf]
        %904 = vrot.lane.b32.xlu0 %v717, 96
        %v905 = vpop.permute.xlu0 %904
        %906 = vrot.lane.b32.xlu0 %v718, 96
        %v907 = vpop.permute.xlu0 %906
        %908 = vrot.lane.b32.xlu0 %v721, 96
        %v909 = vpop.permute.xlu0 %908
        %910 = vrot.lane.b32.xlu0 %v719, 96
        %v911 = vpop.permute.xlu0 %910
        %912 = vrot.lane.b32.xlu0 %v720, 96
        %v913 = vpop.permute.xlu0 %912
        %914 = vrot.lane.b32.xlu0 %v722, 96
        %v915 = vpop.permute.xlu0 %914
        %vm916 = vcmask 785408
        %v917 = vsel %vm916, %v905, %v907
        %v918 = vsel %vm916, %v907, %v909
        %v919 = vsel %vm916, %v911, %v913
        %v920 = vsel %vm916, %v913, %v915
        %v926 = vsel %vm753, %v903, 0
        %928 = vmatprep.subr.mxu0 0.0
        %929 = vmatpush1.msra.mxu0 0.0
        %930 = vmatprep.subr.mxu0 0.0
        %931 = vmatpush1.msra.mxu0 0.0
        %932 = vmatprep.subr.mxu0 0.0
        %933 = vmatpush1.msra.mxu0 0.0
        %934 = vmatprep.subr.mxu0 0.0
        %935 = vmatpush1.msra.mxu0 0.0
        %936 = vmatprep.subr.mxu0 0.0
        %937 = vmatpush1.msra.mxu0 0.0
        %938 = vmatprep.subr.mxu0 0.0
        %939 = vmatpush1.msra.mxu0 0.0
        %940 = vmatprep.subr.mxu0 0.0
        %941 = vmatpush1.msra.mxu0 0.0
        %942 = vmatprep.subr.mxu0 0.0
        %943 = vmatpush1.msra.mxu0 0.0
        %944 = vmatprep.subr.mxu0 0.0
        %945 = vmatpush1.msra.mxu0 0.0
        %946 = vmatprep.subr.mxu0 0.0
        %947 = vmatpush1.msra.mxu0 0.0
        %948 = vmatprep.subr.mxu0 0.0
        %949 = vmatpush1.msra.mxu0 0.0
        %950 = vmatprep.subr.mxu0 0.0
        %951 = vmatpush1.msra.mxu0 0.0
        %952 = vmatprep.subr.mxu0 0.0
        %953 = vmatpush1.msra.mxu0 0.0
        %954 = vmatprep.subr.mxu0 0.0
        %955 = vmatpush1.msra.mxu0 0.0
        %956 = vmatprep.subr.mxu0 %v920
        %957 = vmatpush1.msra.mxu0 %v919
        %958 = vmatprep.subr.mxu0 %v918
        %959 = vmatpush1.msra.mxu0 %v917
        %960 = vmatprep.subr.mxu0 0.0
        %961 = vmatpush2.msra.mxu0 0.0
        %962 = vmatprep.subr.mxu0 0.0
        %963 = vmatpush2.msra.mxu0 0.0
        %964 = vmatprep.subr.mxu0 0.0
        %965 = vmatpush2.msra.mxu0 0.0
        %966 = vmatprep.subr.mxu0 0.0
        %967 = vmatpush2.msra.mxu0 0.0
        %968 = vmatprep.subr.mxu0 0.0
        %969 = vmatpush2.msra.mxu0 0.0
        %970 = vmatprep.subr.mxu0 0.0
        %971 = vmatpush2.msra.mxu0 0.0
        %972 = vmatprep.subr.mxu0 0.0
        %973 = vmatpush2.msra.mxu0 0.0
        %974 = vmatprep.subr.mxu0 0.0
        %975 = vmatpush2.msra.mxu0 0.0
        %976 = vmatprep.subr.mxu0 0.0
        %977 = vmatpush2.msra.mxu0 0.0
        %978 = vmatprep.subr.mxu0 0.0
        %979 = vmatpush2.msra.mxu0 0.0
        %980 = vmatprep.subr.mxu0 0.0
        %981 = vmatpush2.msra.mxu0 0.0
        %982 = vmatprep.subr.mxu0 0.0
        %983 = vmatpush2.msra.mxu0 0.0
        %984 = vmatprep.subr.mxu0 0.0
        %985 = vmatpush2.msra.mxu0 0.0
        %986 = vmatprep.subr.mxu0 0.0
        %987 = vmatpush2.msra.mxu0 0.0
        %988 = vmatprep.subr.mxu0 0.0
        %989 = vmatpush2.msra.mxu0 0.0
        %990 = vmatprep.subr.mxu0 0.0
        %991 = vmatpush2.msra.mxu0 0.0
        %992 = vmatprep.mubr.f32.mxu0 0.0
        %993 = vmatmul.mubr.f32.gmra.mxu0 %v926
        %v994 = vpop.f32.mrf.mxu0
        %v995 = vadd.f32 0.0, %v994
        %v996 = vpop.f32.mrf.mxu0
        %v997 = vadd.f32 0.0, %v996
        %998 = vdwg.mxu0
        %v999 = vadd.f32 %v898, %v995
        %v1000 = vadd.f32 %v900, %v997
        %s1001 = scalar_lea.vmem %s2, 12
        %v1002 = vld [vmem:[%s1001] sm:$0xf]
        %1003 = vrot.lane.b32.xlu0 %v717, 80
        %v1004 = vpop.permute.xlu0 %1003
        %1005 = vrot.lane.b32.xlu0 %v718, 80
        %v1006 = vpop.permute.xlu0 %1005
        %1007 = vrot.lane.b32.xlu0 %v721, 80
        %v1008 = vpop.permute.xlu0 %1007
        %1009 = vrot.lane.b32.xlu0 %v719, 80
        %v1010 = vpop.permute.xlu0 %1009
        %1011 = vrot.lane.b32.xlu0 %v720, 80
        %v1012 = vpop.permute.xlu0 %1011
        %1013 = vrot.lane.b32.xlu0 %v722, 80
        %v1014 = vpop.permute.xlu0 %1013
        %vm1015 = vcmask 654336
        %v1016 = vsel %vm1015, %v1004, %v1006
        %v1017 = vsel %vm1015, %v1006, %v1008
        %v1018 = vsel %vm1015, %v1010, %v1012
        %v1019 = vsel %vm1015, %v1012, %v1014
        %v1025 = vsel %vm753, %v1002, 0
        %1027 = vmatprep.subr.mxu0 0.0
        %1028 = vmatpush1.msra.mxu0 0.0
        %1029 = vmatprep.subr.mxu0 0.0
        %1030 = vmatpush1.msra.mxu0 0.0
        %1031 = vmatprep.subr.mxu0 0.0
        %1032 = vmatpush1.msra.mxu0 0.0
        %1033 = vmatprep.subr.mxu0 0.0
        %1034 = vmatpush1.msra.mxu0 0.0
        %1035 = vmatprep.subr.mxu0 0.0
        %1036 = vmatpush1.msra.mxu0 0.0
        %1037 = vmatprep.subr.mxu0 0.0
        %1038 = vmatpush1.msra.mxu0 0.0
        %1039 = vmatprep.subr.mxu0 0.0
        %1040 = vmatpush1.msra.mxu0 0.0
        %1041 = vmatprep.subr.mxu0 0.0
        %1042 = vmatpush1.msra.mxu0 0.0
        %1043 = vmatprep.subr.mxu0 0.0
        %1044 = vmatpush1.msra.mxu0 0.0
        %1045 = vmatprep.subr.mxu0 0.0
        %1046 = vmatpush1.msra.mxu0 0.0
        %1047 = vmatprep.subr.mxu0 0.0
        %1048 = vmatpush1.msra.mxu0 0.0
        %1049 = vmatprep.subr.mxu0 0.0
        %1050 = vmatpush1.msra.mxu0 0.0
        %1051 = vmatprep.subr.mxu0 0.0
        %1052 = vmatpush1.msra.mxu0 0.0
        %1053 = vmatprep.subr.mxu0 0.0
        %1054 = vmatpush1.msra.mxu0 0.0
        %1055 = vmatprep.subr.mxu0 %v1019
        %1056 = vmatpush1.msra.mxu0 %v1018
        %1057 = vmatprep.subr.mxu0 %v1017
        %1058 = vmatpush1.msra.mxu0 %v1016
        %1059 = vmatprep.subr.mxu0 0.0
        %1060 = vmatpush2.msra.mxu0 0.0
        %1061 = vmatprep.subr.mxu0 0.0
        %1062 = vmatpush2.msra.mxu0 0.0
        %1063 = vmatprep.subr.mxu0 0.0
        %1064 = vmatpush2.msra.mxu0 0.0
        %1065 = vmatprep.subr.mxu0 0.0
        %1066 = vmatpush2.msra.mxu0 0.0
        %1067 = vmatprep.subr.mxu0 0.0
        %1068 = vmatpush2.msra.mxu0 0.0
        %1069 = vmatprep.subr.mxu0 0.0
        %1070 = vmatpush2.msra.mxu0 0.0
        %1071 = vmatprep.subr.mxu0 0.0
        %1072 = vmatpush2.msra.mxu0 0.0
        %1073 = vmatprep.subr.mxu0 0.0
        %1074 = vmatpush2.msra.mxu0 0.0
        %1075 = vmatprep.subr.mxu0 0.0
        %1076 = vmatpush2.msra.mxu0 0.0
        %1077 = vmatprep.subr.mxu0 0.0
        %1078 = vmatpush2.msra.mxu0 0.0
        %1079 = vmatprep.subr.mxu0 0.0
        %1080 = vmatpush2.msra.mxu0 0.0
        %1081 = vmatprep.subr.mxu0 0.0
        %1082 = vmatpush2.msra.mxu0 0.0
        %1083 = vmatprep.subr.mxu0 0.0
        %1084 = vmatpush2.msra.mxu0 0.0
        %1085 = vmatprep.subr.mxu0 0.0
        %1086 = vmatpush2.msra.mxu0 0.0
        %1087 = vmatprep.subr.mxu0 0.0
        %1088 = vmatpush2.msra.mxu0 0.0
        %1089 = vmatprep.subr.mxu0 0.0
        %1090 = vmatpush2.msra.mxu0 0.0
        %1091 = vmatprep.mubr.f32.mxu0 0.0
        %1092 = vmatmul.mubr.f32.gmra.mxu0 %v1025
        %v1093 = vpop.f32.mrf.mxu0
        %v1094 = vadd.f32 0.0, %v1093
        %v1095 = vpop.f32.mrf.mxu0
        %v1096 = vadd.f32 0.0, %v1095
        %1097 = vdwg.mxu0
        %v1098 = vadd.f32 %v999, %v1094
        %v1099 = vadd.f32 %v1000, %v1096
        %s1100 = scalar_lea.vmem %s2, 16
        %v1101 = vld [vmem:[%s1100] sm:$0xf]
        %1102 = vrot.lane.b32.xlu0 %v717, 64
        %v1103 = vpop.permute.xlu0 %1102
        %1104 = vrot.lane.b32.xlu0 %v718, 64
        %v1105 = vpop.permute.xlu0 %1104
        %1106 = vrot.lane.b32.xlu0 %v721, 64
        %v1107 = vpop.permute.xlu0 %1106
        %1108 = vrot.lane.b32.xlu0 %v719, 64
        %v1109 = vpop.permute.xlu0 %1108
        %1110 = vrot.lane.b32.xlu0 %v720, 64
        %v1111 = vpop.permute.xlu0 %1110
        %1112 = vrot.lane.b32.xlu0 %v722, 64
        %v1113 = vpop.permute.xlu0 %1112
        %vm1114 = vcmask 523264
        %v1115 = vsel %vm1114, %v1103, %v1105
        %v1116 = vsel %vm1114, %v1105, %v1107
        %v1117 = vsel %vm1114, %v1109, %v1111
        %v1118 = vsel %vm1114, %v1111, %v1113
        %v1124 = vsel %vm753, %v1101, 0
        %1126 = vmatprep.subr.mxu0 0.0
        %1127 = vmatpush1.msra.mxu0 0.0
        %1128 = vmatprep.subr.mxu0 0.0
        %1129 = vmatpush1.msra.mxu0 0.0
        %1130 = vmatprep.subr.mxu0 0.0
        %1131 = vmatpush1.msra.mxu0 0.0
        %1132 = vmatprep.subr.mxu0 0.0
        %1133 = vmatpush1.msra.mxu0 0.0
        %1134 = vmatprep.subr.mxu0 0.0
        %1135 = vmatpush1.msra.mxu0 0.0
        %1136 = vmatprep.subr.mxu0 0.0
        %1137 = vmatpush1.msra.mxu0 0.0
        %1138 = vmatprep.subr.mxu0 0.0
        %1139 = vmatpush1.msra.mxu0 0.0
        %1140 = vmatprep.subr.mxu0 0.0
        %1141 = vmatpush1.msra.mxu0 0.0
        %1142 = vmatprep.subr.mxu0 0.0
        %1143 = vmatpush1.msra.mxu0 0.0
        %1144 = vmatprep.subr.mxu0 0.0
        %1145 = vmatpush1.msra.mxu0 0.0
        %1146 = vmatprep.subr.mxu0 0.0
        %1147 = vmatpush1.msra.mxu0 0.0
        %1148 = vmatprep.subr.mxu0 0.0
        %1149 = vmatpush1.msra.mxu0 0.0
        %1150 = vmatprep.subr.mxu0 0.0
        %1151 = vmatpush1.msra.mxu0 0.0
        %1152 = vmatprep.subr.mxu0 0.0
        %1153 = vmatpush1.msra.mxu0 0.0
        %1154 = vmatprep.subr.mxu0 %v1118
        %1155 = vmatpush1.msra.mxu0 %v1117
        %1156 = vmatprep.subr.mxu0 %v1116
        %1157 = vmatpush1.msra.mxu0 %v1115
        %1158 = vmatprep.subr.mxu0 0.0
        %1159 = vmatpush2.msra.mxu0 0.0
        %1160 = vmatprep.subr.mxu0 0.0
        %1161 = vmatpush2.msra.mxu0 0.0
        %1162 = vmatprep.subr.mxu0 0.0
        %1163 = vmatpush2.msra.mxu0 0.0
        %1164 = vmatprep.subr.mxu0 0.0
        %1165 = vmatpush2.msra.mxu0 0.0
        %1166 = vmatprep.subr.mxu0 0.0
        %1167 = vmatpush2.msra.mxu0 0.0
        %1168 = vmatprep.subr.mxu0 0.0
        %1169 = vmatpush2.msra.mxu0 0.0
        %1170 = vmatprep.subr.mxu0 0.0
        %1171 = vmatpush2.msra.mxu0 0.0
        %1172 = vmatprep.subr.mxu0 0.0
        %1173 = vmatpush2.msra.mxu0 0.0
        %1174 = vmatprep.subr.mxu0 0.0
        %1175 = vmatpush2.msra.mxu0 0.0
        %1176 = vmatprep.subr.mxu0 0.0
        %1177 = vmatpush2.msra.mxu0 0.0
        %1178 = vmatprep.subr.mxu0 0.0
        %1179 = vmatpush2.msra.mxu0 0.0
        %1180 = vmatprep.subr.mxu0 0.0
        %1181 = vmatpush2.msra.mxu0 0.0
        %1182 = vmatprep.subr.mxu0 0.0
        %1183 = vmatpush2.msra.mxu0 0.0
        %1184 = vmatprep.subr.mxu0 0.0
        %1185 = vmatpush2.msra.mxu0 0.0
        %1186 = vmatprep.subr.mxu0 0.0
        %1187 = vmatpush2.msra.mxu0 0.0
        %1188 = vmatprep.subr.mxu0 0.0
        %1189 = vmatpush2.msra.mxu0 0.0
        %1190 = vmatprep.mubr.f32.mxu0 0.0
        %1191 = vmatmul.mubr.f32.gmra.mxu0 %v1124
        %v1192 = vpop.f32.mrf.mxu0
        %v1193 = vadd.f32 0.0, %v1192
        %v1194 = vpop.f32.mrf.mxu0
        %v1195 = vadd.f32 0.0, %v1194
        %1196 = vdwg.mxu0
        %v1197 = vadd.f32 %v1098, %v1193
        %v1198 = vadd.f32 %v1099, %v1195
        %v1199 = vld [vmem:[%s3] sm:$0xf]
        %1201 = vset.pattern.permute.xlu0 0
        %1202 = vperm.xlu0 %1201, %v1199
        %v1203 = vpop.permute.xlu0 %1202
        %v1205 = vadd.f32 %v1197, %v1203
        %v1206 = vadd.f32 %v1198, %v1203
        %v1207 = vmax.f32 %v1205, 0.0
        %v1208 = vmax.f32 %v1206, 0.0
        %v1209 = vld [vmem:[%s4] sm:$0xff]
        %vm1210 = vcmask 31744
        %v1212 = vsel %vm1210, %v1209, 0
        %vm1214 = vcmask 1043456
        %v1216 = vsel %vm1214, %v1207, 0
        %v1219 = vsel %vm1214, %v1208, 0
        %1221 = vmatprep.subr.mxu0 0.0
        %1222 = vmatpush1.msra.mxu0 0.0
        %1223 = vmatprep.subr.mxu0 0.0
        %1224 = vmatpush1.msra.mxu0 0.0
        %1225 = vmatprep.subr.mxu0 0.0
        %1226 = vmatpush1.msra.mxu0 0.0
        %1227 = vmatprep.subr.mxu0 0.0
        %1228 = vmatpush1.msra.mxu0 0.0
        %1229 = vmatprep.subr.mxu0 0.0
        %1230 = vmatpush1.msra.mxu0 0.0
        %1231 = vmatprep.subr.mxu0 0.0
        %1232 = vmatpush1.msra.mxu0 0.0
        %1233 = vmatprep.subr.mxu0 0.0
        %1234 = vmatpush1.msra.mxu0 0.0
        %1235 = vmatprep.subr.mxu0 0.0
        %1236 = vmatpush1.msra.mxu0 0.0
        %1237 = vmatprep.subr.mxu0 0.0
        %1238 = vmatpush1.msra.mxu0 0.0
        %1239 = vmatprep.subr.mxu0 0.0
        %1240 = vmatpush1.msra.mxu0 0.0
        %1241 = vmatprep.subr.mxu0 0.0
        %1242 = vmatpush1.msra.mxu0 0.0
        %1243 = vmatprep.subr.mxu0 0.0
        %1244 = vmatpush1.msra.mxu0 0.0
        %1245 = vmatprep.subr.mxu0 0.0
        %1246 = vmatpush1.msra.mxu0 0.0
        %1247 = vmatprep.subr.mxu0 0.0
        %1248 = vmatpush1.msra.mxu0 0.0
        %1249 = vmatprep.subr.mxu0 0.0
        %1250 = vmatpush1.msra.mxu0 0.0
        %1251 = vmatprep.subr.mxu0 %v1219
        %1252 = vmatpush1.msra.mxu0 %v1216
        %1253 = vmatprep.subr.mxu0 0.0
        %1254 = vmatpush2.msra.mxu0 0.0
        %1255 = vmatprep.subr.mxu0 0.0
        %1256 = vmatpush2.msra.mxu0 0.0
        %1257 = vmatprep.subr.mxu0 0.0
        %1258 = vmatpush2.msra.mxu0 0.0
        %1259 = vmatprep.subr.mxu0 0.0
        %1260 = vmatpush2.msra.mxu0 0.0
        %1261 = vmatprep.subr.mxu0 0.0
        %1262 = vmatpush2.msra.mxu0 0.0
        %1263 = vmatprep.subr.mxu0 0.0
        %1264 = vmatpush2.msra.mxu0 0.0
        %1265 = vmatprep.subr.mxu0 0.0
        %1266 = vmatpush2.msra.mxu0 0.0
        %1267 = vmatprep.subr.mxu0 0.0
        %1268 = vmatpush2.msra.mxu0 0.0
        %1269 = vmatprep.subr.mxu0 0.0
        %1270 = vmatpush2.msra.mxu0 0.0
        %1271 = vmatprep.subr.mxu0 0.0
        %1272 = vmatpush2.msra.mxu0 0.0
        %1273 = vmatprep.subr.mxu0 0.0
        %1274 = vmatpush2.msra.mxu0 0.0
        %1275 = vmatprep.subr.mxu0 0.0
        %1276 = vmatpush2.msra.mxu0 0.0
        %1277 = vmatprep.subr.mxu0 0.0
        %1278 = vmatpush2.msra.mxu0 0.0
        %1279 = vmatprep.subr.mxu0 0.0
        %1280 = vmatpush2.msra.mxu0 0.0
        %1281 = vmatprep.subr.mxu0 0.0
        %1282 = vmatpush2.msra.mxu0 0.0
        %1283 = vmatprep.subr.mxu0 0.0
        %1284 = vmatpush2.msra.mxu0 0.0
        %1285 = vmatprep.mubr.f32.mxu0 0.0
        %1286 = vmatmul.mubr.f32.gmra.mxu0 %v1212
        %v1287 = vpop.f32.mrf.mxu0
        %v1288 = vadd.f32 0.0, %v1287
        %v1289 = vpop.f32.mrf.mxu0
        %v1290 = vadd.f32 0.0, %v1289
        %1291 = vdwg.mxu0
        %1292 = vst [vmem:[%s715] sm:$0xff] %v1288
        %1293 = vst [vmem:[%s715 + $0x8] sm:$0xff] %v1290
        %s1294 = smul.u32 2, %s16
        %p1295 = scmp.lt.s32.totalorder %s1294, 3
        %s1296 = scalar_select %p1295, %s1294, 3
        %s1297 = smul.addr %s1296, 8
        %s1298 = scalar_lea.vmem %s5, %s1297
        // Predicated region
        $region145: #{fcn_head_nopooling.1} parent=135 // pred_check
          %p1299 = pneg %p153
        $region146: #{fcn_head_nopooling.1} parent=135 // pred_check_branch
          %1301 = sbr.rel (%p1299) target = $region148
        $region147: #{fcn_head_nopooling.1} parent=135 // pred_region
          %s1302 = smul.u32 2, %s16
        $region148: #{fcn_head_nopooling.1} parent=135 // pred_fallthru
          _
      $region136: #{fcn_head_nopooling.1} parent=5 // pred_fallthru
        _
      %p1303 = scmp.le.s32.totalorder 2, %s11
      // Predicated region
      $region149: #{fcn_head_nopooling.1} parent=5 // pred_check
        %p1304 = pneg %p1303
      $region150: #{fcn_head_nopooling.1} parent=5 // pred_check_branch
        %1306 = sbr.rel (%p1304) target = $region152
      $region151: #{fcn_head_nopooling.1} parent=5 // pred_region
        %s1307 = ssub.s32 %s11, 2
        // Predicated region
        $region153: #{fcn_head_nopooling.1} parent=151 // pred_check
          %p1308 = pneg %p159
        $region154: #{fcn_head_nopooling.1} parent=151 // pred_check_branch
          %1310 = sbr.rel (%p1308) target = $region156
        $region155: #{fcn_head_nopooling.1} parent=151 // pred_region
          %s1311 = smul.u32 2, %s17
          %p1312 = scmp.lt.s32.totalorder %s1311, 3
          %s1313 = scalar_select %p1312, %s1311, 3
          %s1314 = smul.addr %s1313, 8
          %s1315 = scalar_lea.vmem %s5, %s1314
        $region156: #{fcn_head_nopooling.1} parent=151 // pred_fallthru
          _
      $region152: #{fcn_head_nopooling.1} parent=5 // pred_fallthru
        _
    $region6: #{fcn_head_nopooling.1} parent=1 // loop_footer
      %s15 = sadd.s32 1, %s11
    $region7: #{fcn_head_nopooling.1} parent=1 // loop_footer_branch
      %10 = sbr.rel target = $region3
    $region8: #{fcn_head_nopooling.1} parent=1 // loop_exit
      _

</llo_original>
